<compile_context>
chip_gen: v6e
topology: v6e:2x2x1
jax: 0.10.0
libtpu: 0.0.40
codegen_flags: <defaults>
</compile_context>

<pallas_src>
import functools

import jax
import jax.numpy as jnp
from jax import lax
from jax.experimental import pallas as pl
from jax.experimental.pallas import tpu as pltpu


def _dw_conv3x3_block(x, w, sel_c, sel_r, *, stride):
    """Depthwise 3x3 conv (padding=1) of one channel block.

    x: (c, H, W) f32, w: (c, 9) f32 per-channel taps (row-major kh, kw).
    sel_c: (W, Wo) f32 0/1 column-downsample matrix (stride > 1 only).
    sel_r: (H, Ho) f32 0/1 row-downsample matrix (stride > 1 only).
    Returns (c, Ho, Wo) f32.
    """
    c, H, W = x.shape

    # Horizontal taps: three column-shifted planes with zero fill at the borders.
    zc = jnp.zeros((c, H, 1), jnp.float32)
    cols = (
        jnp.concatenate([zc, x[:, :, :W - 1]], axis=2),   # kw=0 -> x[., ., q-1]
        x,                                                 # kw=1 -> x[., ., q  ]
        jnp.concatenate([x[:, :, 1:], zc], axis=2),        # kw=2 -> x[., ., q+1]
    )

    # Vertical taps: per kh, weight the three column planes, row-shift, accumulate.
    zr = jnp.zeros((c, 1, W), jnp.float32)
    y = jnp.zeros((c, H, W), jnp.float32)
    for kh, dh in enumerate((-1, 0, 1)):
        inner = jnp.zeros((c, H, W), jnp.float32)
        for kw in range(3):
            wt = w[:, 3 * kh + kw][:, None, None]          # (c, 1, 1)
            inner = inner + wt * cols[kw]
        if dh == -1:
            inner = jnp.concatenate([zr, inner[:, :H - 1, :]], axis=1)
        elif dh == 1:
            inner = jnp.concatenate([inner[:, 1:, :], zr], axis=1)
        y = y + inner                                      # y[r,q]+=inner[r+dh,q]

    if stride == 1:
        return y

    # stride > 1: exact 0/1 selection downsample on the MXU (tiny vs the conv).
    Wo = sel_c.shape[1]
    Ho = sel_r.shape[1]
    yc = jnp.dot(y.reshape(c * H, W), sel_c,
                 preferred_element_type=jnp.float32,
                 precision=lax.Precision.HIGHEST).reshape(c, H, Wo)
    yct = jnp.swapaxes(yc, 1, 2).reshape(c * Wo, H)        # (c*Wo, H)
    yr = jnp.dot(yct, sel_r,
                 preferred_element_type=jnp.float32,
                 precision=lax.Precision.HIGHEST).reshape(c, Wo, Ho)
    return jnp.swapaxes(yr, 1, 2)                          # (c, Ho, Wo)


def _dw_conv_stats_kernel(*refs, stride):
    """Pass 1: conv block -> raw f32 output + per-channel sum / sum^2 accumulation."""
    if stride == 1:
        x_ref, w_ref, y_ref, stats_ref = refs
        sel_c = sel_r = None
    else:
        x_ref, w_ref, selc_ref, selr_ref, y_ref, stats_ref = refs
        sel_c = selc_ref[...]
        sel_r = selr_ref[...]

    @pl.when(pl.program_id(1) == 0)
    def _():
        stats_ref[...] = jnp.zeros_like(stats_ref)

    x = x_ref[0].astype(jnp.float32)                       # (c, H, W)
    w = w_ref[...].astype(jnp.float32)                     # (c, 9)
    y = _dw_conv3x3_block(x, w, sel_c, sel_r, stride=stride)  # (c, Ho, Wo) f32

    y_ref[0] = y.astype(y_ref.dtype)
    s1 = jnp.sum(jnp.sum(y, axis=2), axis=1)               # (c,)
    s2 = jnp.sum(jnp.sum(y * y, axis=2), axis=1)           # (c,)
    stats_ref[0, :] = stats_ref[0, :] + s1
    stats_ref[1, :] = stats_ref[1, :] + s2


def _bn_relu6_kernel(y_ref, aff_ref, o_ref):
    """Pass 2: elementwise folded-BN affine + ReLU6 (lane-dense flattened spatial)."""
    y = y_ref[0]                                           # (c, L) f32
    scale = aff_ref[:, 0:1]                                # (c, 1)
    shift = aff_ref[:, 1:2]                                # (c, 1)
    z = y * scale + shift
    o_ref[0] = jnp.clip(z, 0.0, 6.0).astype(o_ref.dtype)


def _pick_channel_block_p1(C, plane_elems, itemsize, target_bytes):
    """Channel tile for pass 1.  The (2, c_blk) stats block puts channels on the
    lane axis, so legal tiles are C itself or multiples of 128 that divide C."""
    cands = [C] + [m for m in range(128, C, 128) if C % m == 0]
    fitting = [c for c in cands if c * plane_elems * itemsize <= target_bytes]
    return max(fitting) if fitting else min(cands)


def _pick_channel_block_p2(C, L, itemsize, target_bytes):
    """Channel tile for pass 2.  Sublane dim of the (c_blk, L) / (c_blk, 2) blocks
    must be a multiple of 8 or the full C."""
    cands = [C] + [d for d in range(8, C, 8) if C % d == 0]
    fitting = [c for c in cands if c * L * itemsize <= target_bytes]
    return max(fitting) if fitting else min(cands)


def depthwise_conv_forward(x_nchw, conv_weight, gamma, beta, *, stride, eps=1e-5):
    """Forward of PFLD DepthwiseConv. x_nchw: (N, Cin, H, W); conv_weight: (Cout,1,3,3)."""
    N, Cin, H, W = x_nchw.shape
    Cout = conv_weight.shape[0]
    assert conv_weight.shape == (Cout, 1, 3, 3) and Cout % Cin == 0
    mult = Cout // Cin
    Ho = (H - 1) // stride + 1
    Wo = (W - 1) // stride + 1

    x = x_nchw
    if mult > 1:
        # TODO(synk): depth multiplier > 1 falls back to an XLA channel repeat;
        # PFLD always uses out_channels == in_channels so the common path is zero-copy.
        x = jnp.repeat(x, mult, axis=1)
    C = Cout
    w9 = conv_weight.reshape(C, 9).astype(jnp.float32)

    target = 2 * 1024 * 1024                               # per-block input budget
    vmem_limit = 48 * 1024 * 1024                          # v7x-safe (64 MiB/TC)

    # ---------------- Pass 1: depthwise conv + batch statistics ----------------
    c_blk = _pick_channel_block_p1(C, H * W, 4, target)
    n_cb = C // c_blk
    grid = (n_cb, N)

    in_specs = [
        pl.BlockSpec((1, c_blk, H, W), lambda cb, n: (n, cb, 0, 0)),
        pl.BlockSpec((c_blk, 9), lambda cb, n: (cb, 0)),
    ]
    call_args = [x, w9]
    if stride > 1:
        # Hoisted, grid-invariant 0/1 downsample matrices (exact in f32).
        sel_c = (jnp.arange(W)[:, None] == stride * jnp.arange(Wo)[None, :]
                 ).astype(jnp.float32)                     # (W, Wo)
        sel_r = (jnp.arange(H)[:, None] == stride * jnp.arange(Ho)[None, :]
                 ).astype(jnp.float32)                     # (H, Ho)
        in_specs += [pl.BlockSpec((W, Wo), lambda cb, n: (0, 0)),
                     pl.BlockSpec((H, Ho), lambda cb, n: (0, 0))]
        call_args += [sel_c, sel_r]

    y_conv, stats = pl.pallas_call(
        functools.partial(_dw_conv_stats_kernel, stride=stride),
        grid=grid,
        in_specs=in_specs,
        out_specs=[pl.BlockSpec((1, c_blk, Ho, Wo), lambda cb, n: (n, cb, 0, 0)),
                   pl.BlockSpec((2, c_blk), lambda cb, n: (0, cb))],
        out_shape=[jax.ShapeDtypeStruct((N, C, Ho, Wo), jnp.float32),
                   jax.ShapeDtypeStruct((2, C), jnp.float32)],
        compiler_params=pltpu.CompilerParams(
            dimension_semantics=("parallel", "arbitrary"),
            vmem_limit_bytes=vmem_limit),
    )(*call_args)

    # Fold train-mode BN batch stats into a per-channel affine (tiny, plain XLA).
    count = jnp.float32(N * Ho * Wo)
    mean = stats[0] / count
    var = jnp.maximum(stats[1] / count - mean * mean, 0.0)  # biased batch variance
    scale = gamma.astype(jnp.float32) * lax.rsqrt(var + eps)
    shift = beta.astype(jnp.float32) - mean * scale
    affine = jnp.stack([scale, shift], axis=1)              # (C, 2)

    # ---------------- Pass 2: elementwise BN + ReLU6 (lane-dense) --------------
    L = Ho * Wo
    y_flat = y_conv.reshape(N, C, L)                        # free metadata reshape
    c_blk2 = _pick_channel_block_p2(C, L, 4, target)
    n_cb2 = C // c_blk2

    out_flat = pl.pallas_call(
        _bn_relu6_kernel,
        grid=(N, n_cb2),
        in_specs=[pl.BlockSpec((1, c_blk2, L), lambda n, cb: (n, cb, 0)),
                  pl.BlockSpec((c_blk2, 2), lambda n, cb: (cb, 0))],
        out_specs=pl.BlockSpec((1, c_blk2, L), lambda n, cb: (n, cb, 0)),
        out_shape=jax.ShapeDtypeStruct((N, C, L), x_nchw.dtype),
        compiler_params=pltpu.CompilerParams(
            dimension_semantics=("parallel", "parallel"),
            vmem_limit_bytes=vmem_limit),
    )(y_flat, affine)

    return out_flat.reshape(N, C, Ho, Wo)


def _reference(x, wgt, gamma, beta, stride, eps=1e-5):
    """Pure-JAX reference matching the PyTorch module (train-mode BN)."""
    y = lax.conv_general_dilated(
        x, wgt, window_strides=(stride, stride), padding=((1, 1), (1, 1)),
        dimension_numbers=("NCHW", "OIHW", "NCHW"),
        feature_group_count=x.shape[1],
        precision=lax.Precision.HIGHEST)
    mean = jnp.mean(y, axis=(0, 2, 3), keepdims=True)
    var = jnp.mean(y * y, axis=(0, 2, 3), keepdims=True) - mean * mean
    z = (y - mean) * lax.rsqrt(var + eps)
    z = z * gamma[None, :, None, None] + beta[None, :, None, None]
    return jnp.clip(z, 0.0, 6.0)


if __name__ == "__main__":
    key = jax.random.PRNGKey(0)
    k1, k2, k3, k4 = jax.random.split(key, 4)

    N, C, H, W = 2, 4, 16, 16
    x = jax.random.normal(k1, (N, C, H, W), jnp.float32)
    conv_weight = 0.2 * jax.random.normal(k2, (C, 1, 3, 3), jnp.float32)  # (out, in/groups, 3, 3)
    gamma = 1.0 + 0.1 * jax.random.normal(k3, (C,), jnp.float32)
    beta = 0.1 * jax.random.normal(k4, (C,), jnp.float32)

    for stride in (2, 1):
        out = depthwise_conv_forward(x, conv_weight, gamma, beta, stride=stride)
        out = jax.block_until_ready(out)
        ref = _reference(x, conv_weight, gamma, beta, stride)
        Ho = (H - 1) // stride + 1
        assert out.shape == ref.shape == (N, C, Ho, Ho), (out.shape, ref.shape)
        max_err = float(jnp.max(jnp.abs(out - ref)))
        assert max_err < 2e-3, f"stride={stride} max_err={max_err}"

    print("KERNEL_OK")
</pallas_src>

<mosaic_0001>
module attributes {stable_mosaic.version = 11 : i64} {
  func.func @_dw_conv_stats_kernel(%arg0: i32, %arg1: i32, %arg2: memref<1x4x16x16xf32, #tpu.memory_space<vmem>>, %arg3: memref<4x9xf32, #tpu.memory_space<vmem>>, %arg4: memref<16x8xf32, #tpu.memory_space<vmem>>, %arg5: memref<16x8xf32, #tpu.memory_space<vmem>>, %arg6: memref<1x4x8x8xf32, #tpu.memory_space<vmem>>, %arg7: memref<2x4xf32, #tpu.memory_space<vmem>>) attributes {dimension_semantics = [#tpu.dimension_semantics<parallel>, #tpu.dimension_semantics<arbitrary>], iteration_bounds = array<i64: 1, 2>, scalar_prefetch = 0 : i64, scratch_operands = 0 : i64, tpu.core_type = #tpu.core_type<tc>, window_params = [{transform_indices = @transform_0, window_bounds = array<i64: 1, 4, 16, 16>}, {transform_indices = @transform_1, window_bounds = array<i64: 4, 9>}, {pipeline_mode = #tpu.pipeline_mode<synchronous>, transform_indices = @transform_2, window_bounds = array<i64: 16, 8>}, {pipeline_mode = #tpu.pipeline_mode<synchronous>, transform_indices = @transform_3, window_bounds = array<i64: 16, 8>}, {transform_indices = @transform_4, window_bounds = array<i64: 1, 4, 8, 8>}, {transform_indices = @transform_5, window_bounds = array<i64: 2, 4>}]} {
    %c0 = arith.constant 0 : index
    %c0_0 = arith.constant 0 : index
    %0 = vector.load %arg4[%c0, %c0_0] : memref<16x8xf32, #tpu.memory_space<vmem>>, vector<16x8xf32>
    %c0_1 = arith.constant 0 : index
    %c0_2 = arith.constant 0 : index
    %1 = vector.load %arg5[%c0_1, %c0_2] : memref<16x8xf32, #tpu.memory_space<vmem>>, vector<16x8xf32>
    %c0_i32 = arith.constant 0 : i32
    %2 = arith.cmpi eq, %arg1, %c0_i32 : i32
    %3 = arith.extui %2 : i1 to i32
    %c0_i32_3 = arith.constant 0 : i32
    %4 = arith.cmpi ne, %3, %c0_i32_3 : i32
    scf.if %4 {
      %cst_32 = arith.constant 0.000000e+00 : f32
      %107 = vector.broadcast %cst_32 : f32 to vector<2x4xf32>
      %c0_33 = arith.constant 0 : index
      %c0_34 = arith.constant 0 : index
      %108 = vector.load %arg7[%c0_33, %c0_34] : memref<2x4xf32, #tpu.memory_space<vmem>>, vector<2x4xf32>
      tpu.vector_store %arg7[%c0_33, %c0_34], %107 {strides = array<i32>} : memref<2x4xf32, #tpu.memory_space<vmem>>, vector<2x4xf32>,
    } else {
    }
    %c0_4 = arith.constant 0 : index
    %c0_5 = arith.constant 0 : index
    %c0_6 = arith.constant 0 : index
    %c0_7 = arith.constant 0 : index
    %5 = vector.load %arg2[%c0_4, %c0_5, %c0_6, %c0_7] : memref<1x4x16x16xf32, #tpu.memory_space<vmem>>, vector<1x4x16x16xf32>
    %6 = vector.shape_cast %5 : vector<1x4x16x16xf32> to vector<4x16x16xf32>
    %c0_8 = arith.constant 0 : index
    %c0_9 = arith.constant 0 : index
    %7 = vector.load %arg3[%c0_8, %c0_9] : memref<4x9xf32, #tpu.memory_space<vmem>>, vector<4x9xf32>
    %cst = arith.constant 0.000000e+00 : f32
    %8 = vector.broadcast %cst : f32 to vector<4x16x1xf32>
    %9 = vector.extract_strided_slice %6 {offsets = [0, 0, 0], sizes = [4, 16, 15], strides = [1, 1, 1]} : vector<4x16x16xf32> to vector<4x16x15xf32>
    %10 = tpu.concatenate %8, %9 in 2 : vector<4x16x1xf32>, vector<4x16x15xf32> -> vector<4x16x16xf32>
    %11 = vector.extract_strided_slice %6 {offsets = [0, 0, 1], sizes = [4, 16, 15], strides = [1, 1, 1]} : vector<4x16x16xf32> to vector<4x16x15xf32>
    %12 = tpu.concatenate %11, %8 in 2 : vector<4x16x15xf32>, vector<4x16x1xf32> -> vector<4x16x16xf32>
    %cst_10 = arith.constant 0.000000e+00 : f32
    %13 = vector.broadcast %cst_10 : f32 to vector<4x1x16xf32>
    %cst_11 = arith.constant 0.000000e+00 : f32
    %14 = vector.broadcast %cst_11 : f32 to vector<4x16x16xf32>
    %cst_12 = arith.constant 0.000000e+00 : f32
    %15 = vector.broadcast %cst_12 : f32 to vector<4x16x16xf32>
    %16 = vector.extract_strided_slice %7 {offsets = [0, 0], sizes = [4, 1], strides = [1, 1]} : vector<4x9xf32> to vector<4x1xf32>
    %17 = vector.shape_cast %16 : vector<4x1xf32> to vector<4xf32>
    %18 = vector.shape_cast %17 : vector<4xf32> to vector<4x1x1xf32>
    %19 = vector.broadcast %18 : vector<4x1x1xf32> to vector<4x16x16xf32>
    %20 = arith.mulf %19, %10 : vector<4x16x16xf32>
    %21 = arith.addf %15, %20 : vector<4x16x16xf32>
    %22 = vector.extract_strided_slice %7 {offsets = [0, 1], sizes = [4, 1], strides = [1, 1]} : vector<4x9xf32> to vector<4x1xf32>
    %23 = vector.shape_cast %22 : vector<4x1xf32> to vector<4xf32>
    %24 = vector.shape_cast %23 : vector<4xf32> to vector<4x1x1xf32>
    %25 = vector.broadcast %24 : vector<4x1x1xf32> to vector<4x16x16xf32>
    %26 = arith.mulf %25, %6 : vector<4x16x16xf32>
    %27 = arith.addf %21, %26 : vector<4x16x16xf32>
    %28 = vector.extract_strided_slice %7 {offsets = [0, 2], sizes = [4, 1], strides = [1, 1]} : vector<4x9xf32> to vector<4x1xf32>
    %29 = vector.shape_cast %28 : vector<4x1xf32> to vector<4xf32>
    %30 = vector.shape_cast %29 : vector<4xf32> to vector<4x1x1xf32>
    %31 = vector.broadcast %30 : vector<4x1x1xf32> to vector<4x16x16xf32>
    %32 = arith.mulf %31, %12 : vector<4x16x16xf32>
    %33 = arith.addf %27, %32 : vector<4x16x16xf32>
    %34 = vector.extract_strided_slice %33 {offsets = [0, 0, 0], sizes = [4, 15, 16], strides = [1, 1, 1]} : vector<4x16x16xf32> to vector<4x15x16xf32>
    %35 = tpu.concatenate %13, %34 in 1 : vector<4x1x16xf32>, vector<4x15x16xf32> -> vector<4x16x16xf32>
    %36 = arith.addf %14, %35 : vector<4x16x16xf32>
    %cst_13 = arith.constant 0.000000e+00 : f32
    %37 = vector.broadcast %cst_13 : f32 to vector<4x16x16xf32>
    %38 = vector.extract_strided_slice %7 {offsets = [0, 3], sizes = [4, 1], strides = [1, 1]} : vector<4x9xf32> to vector<4x1xf32>
    %39 = vector.shape_cast %38 : vector<4x1xf32> to vector<4xf32>
    %40 = vector.shape_cast %39 : vector<4xf32> to vector<4x1x1xf32>
    %41 = vector.broadcast %40 : vector<4x1x1xf32> to vector<4x16x16xf32>
    %42 = arith.mulf %41, %10 : vector<4x16x16xf32>
    %43 = arith.addf %37, %42 : vector<4x16x16xf32>
    %44 = vector.extract_strided_slice %7 {offsets = [0, 4], sizes = [4, 1], strides = [1, 1]} : vector<4x9xf32> to vector<4x1xf32>
    %45 = vector.shape_cast %44 : vector<4x1xf32> to vector<4xf32>
    %46 = vector.shape_cast %45 : vector<4xf32> to vector<4x1x1xf32>
    %47 = vector.broadcast %46 : vector<4x1x1xf32> to vector<4x16x16xf32>
    %48 = arith.mulf %47, %6 : vector<4x16x16xf32>
    %49 = arith.addf %43, %48 : vector<4x16x16xf32>
    %50 = vector.extract_strided_slice %7 {offsets = [0, 5], sizes = [4, 1], strides = [1, 1]} : vector<4x9xf32> to vector<4x1xf32>
    %51 = vector.shape_cast %50 : vector<4x1xf32> to vector<4xf32>
    %52 = vector.shape_cast %51 : vector<4xf32> to vector<4x1x1xf32>
    %53 = vector.broadcast %52 : vector<4x1x1xf32> to vector<4x16x16xf32>
    %54 = arith.mulf %53, %12 : vector<4x16x16xf32>
    %55 = arith.addf %49, %54 : vector<4x16x16xf32>
    %56 = arith.addf %36, %55 : vector<4x16x16xf32>
    %cst_14 = arith.constant 0.000000e+00 : f32
    %57 = vector.broadcast %cst_14 : f32 to vector<4x16x16xf32>
    %58 = vector.extract_strided_slice %7 {offsets = [0, 6], sizes = [4, 1], strides = [1, 1]} : vector<4x9xf32> to vector<4x1xf32>
    %59 = vector.shape_cast %58 : vector<4x1xf32> to vector<4xf32>
    %60 = vector.shape_cast %59 : vector<4xf32> to vector<4x1x1xf32>
    %61 = vector.broadcast %60 : vector<4x1x1xf32> to vector<4x16x16xf32>
    %62 = arith.mulf %61, %10 : vector<4x16x16xf32>
    %63 = arith.addf %57, %62 : vector<4x16x16xf32>
    %64 = vector.extract_strided_slice %7 {offsets = [0, 7], sizes = [4, 1], strides = [1, 1]} : vector<4x9xf32> to vector<4x1xf32>
    %65 = vector.shape_cast %64 : vector<4x1xf32> to vector<4xf32>
    %66 = vector.shape_cast %65 : vector<4xf32> to vector<4x1x1xf32>
    %67 = vector.broadcast %66 : vector<4x1x1xf32> to vector<4x16x16xf32>
    %68 = arith.mulf %67, %6 : vector<4x16x16xf32>
    %69 = arith.addf %63, %68 : vector<4x16x16xf32>
    %70 = vector.extract_strided_slice %7 {offsets = [0, 8], sizes = [4, 1], strides = [1, 1]} : vector<4x9xf32> to vector<4x1xf32>
    %71 = vector.shape_cast %70 : vector<4x1xf32> to vector<4xf32>
    %72 = vector.shape_cast %71 : vector<4xf32> to vector<4x1x1xf32>
    %73 = vector.broadcast %72 : vector<4x1x1xf32> to vector<4x16x16xf32>
    %74 = arith.mulf %73, %12 : vector<4x16x16xf32>
    %75 = arith.addf %69, %74 : vector<4x16x16xf32>
    %76 = vector.extract_strided_slice %75 {offsets = [0, 1, 0], sizes = [4, 15, 16], strides = [1, 1, 1]} : vector<4x16x16xf32> to vector<4x15x16xf32>
    %77 = tpu.concatenate %76, %13 in 1 : vector<4x15x16xf32>, vector<4x1x16xf32> -> vector<4x16x16xf32>
    %78 = arith.addf %56, %77 : vector<4x16x16xf32>
    %79 = vector.shape_cast %78 : vector<4x16x16xf32> to vector<64x16xf32>
    %cst_15 = arith.constant dense<0.000000e+00> : vector<64x8xf32>
    %80 = tpu.matmul %79, %0, %cst_15 {dimension_numbers = #tpu.dot_dimension_numbers<[1], [0], [0], [1], [0, 0, 1, 1], [], []>, precision = #tpu.contract_precision<fp32>} : vector<64x16xf32>, vector<16x8xf32>, vector<64x8xf32> -> vector<64x8xf32>
    %81 = vector.shape_cast %80 : vector<64x8xf32> to vector<4x16x8xf32>
    %82 = tpu.transpose %81, [0, 2, 1] : vector<4x16x8xf32> -> vector<4x8x16xf32>
    %83 = vector.shape_cast %82 : vector<4x8x16xf32> to vector<32x16xf32>
    %cst_16 = arith.constant dense<0.000000e+00> : vector<32x8xf32>
    %84 = tpu.matmul %83, %1, %cst_16 {dimension_numbers = #tpu.dot_dimension_numbers<[1], [0], [0], [1], [0, 0, 1, 1], [], []>, precision = #tpu.contract_precision<fp32>} : vector<32x16xf32>, vector<16x8xf32>, vector<32x8xf32> -> vector<32x8xf32>
    %85 = vector.shape_cast %84 : vector<32x8xf32> to vector<4x8x8xf32>
    %86 = tpu.transpose %85, [0, 2, 1] : vector<4x8x8xf32> -> vector<4x8x8xf32>
    %c0_17 = arith.constant 0 : index
    %c0_18 = arith.constant 0 : index
    %c0_19 = arith.constant 0 : index
    %c0_20 = arith.constant 0 : index
    %87 = vector.load %arg6[%c0_17, %c0_18, %c0_19, %c0_20] : memref<1x4x8x8xf32, #tpu.memory_space<vmem>>, vector<1x4x8x8xf32>
    %88 = vector.shape_cast %87 : vector<1x4x8x8xf32> to vector<4x8x8xf32>
    %89 = vector.shape_cast %86 : vector<4x8x8xf32> to vector<1x4x8x8xf32>
    tpu.vector_store %arg6[%c0_17, %c0_18, %c0_19, %c0_20], %89 {strides = array<i32>} : memref<1x4x8x8xf32, #tpu.memory_space<vmem>>, vector<1x4x8x8xf32>,
    %cst_21 = arith.constant dense<0.000000e+00> : vector<4x8xf32>
    %90 = vector.multi_reduction <add>, %86, %cst_21 [2] : vector<4x8x8xf32> to vector<4x8xf32>
    %cst_22 = arith.constant dense<0.000000e+00> : vector<4xf32>
    %91 = vector.multi_reduction <add>, %90, %cst_22 [1] : vector<4x8xf32> to vector<4xf32>
    %92 = arith.mulf %86, %86 : vector<4x8x8xf32>
    %cst_23 = arith.constant dense<0.000000e+00> : vector<4x8xf32>
    %93 = vector.multi_reduction <add>, %92, %cst_23 [2] : vector<4x8x8xf32> to vector<4x8xf32>
    %cst_24 = arith.constant dense<0.000000e+00> : vector<4xf32>
    %94 = vector.multi_reduction <add>, %93, %cst_24 [1] : vector<4x8xf32> to vector<4xf32>
    %c0_25 = arith.constant 0 : index
    %c0_26 = arith.constant 0 : index
    %95 = vector.load %arg7[%c0_25, %c0_26] : memref<2x4xf32, #tpu.memory_space<vmem>>, vector<1x4xf32>
    %96 = vector.shape_cast %95 : vector<1x4xf32> to vector<4xf32>
    %97 = arith.addf %96, %91 : vector<4xf32>
    %c0_27 = arith.constant 0 : index
    %c0_28 = arith.constant 0 : index
    %98 = vector.load %arg7[%c0_27, %c0_28] : memref<2x4xf32, #tpu.memory_space<vmem>>, vector<1x4xf32>
    %99 = vector.shape_cast %98 : vector<1x4xf32> to vector<4xf32>
    %100 = vector.shape_cast %97 : vector<4xf32> to vector<1x4xf32>
    tpu.vector_store %arg7[%c0_27, %c0_28], %100 {strides = array<i32>} : memref<2x4xf32, #tpu.memory_space<vmem>>, vector<1x4xf32>,
    %c1 = arith.constant 1 : index
    %c0_29 = arith.constant 0 : index
    %101 = vector.load %arg7[%c1, %c0_29] : memref<2x4xf32, #tpu.memory_space<vmem>>, vector<1x4xf32>
    %102 = vector.shape_cast %101 : vector<1x4xf32> to vector<4xf32>
    %103 = arith.addf %102, %94 : vector<4xf32>
    %c1_30 = arith.constant 1 : index
    %c0_31 = arith.constant 0 : index
    %104 = vector.load %arg7[%c1_30, %c0_31] : memref<2x4xf32, #tpu.memory_space<vmem>>, vector<1x4xf32>
    %105 = vector.shape_cast %104 : vector<1x4xf32> to vector<4xf32>
    %106 = vector.shape_cast %103 : vector<4xf32> to vector<1x4xf32>
    tpu.vector_store %arg7[%c1_30, %c0_31], %106 {strides = array<i32>} : memref<2x4xf32, #tpu.memory_space<vmem>>, vector<1x4xf32>,
    return
  }
  func.func @transform_0(%arg0: i32, %arg1: i32) -> (i32, i32, i32, i32) {
    %c0_i32 = arith.constant 0 : i32
    %c0_i32_0 = arith.constant 0 : i32
    %c0_i32_1 = arith.constant 0 : i32
    return %arg1, %arg0, %c0_i32, %c0_i32_0 : i32, i32, i32, i32
  }
  func.func @transform_1(%arg0: i32, %arg1: i32) -> (i32, i32) {
    %c0_i32 = arith.constant 0 : i32
    %c0_i32_0 = arith.constant 0 : i32
    return %arg0, %c0_i32 : i32, i32
  }
  func.func @transform_2(%arg0: i32, %arg1: i32) -> (i32, i32) {
    %c0_i32 = arith.constant 0 : i32
    %c0_i32_0 = arith.constant 0 : i32
    %c0_i32_1 = arith.constant 0 : i32
    return %c0_i32, %c0_i32_0 : i32, i32
  }
  func.func @transform_3(%arg0: i32, %arg1: i32) -> (i32, i32) {
    %c0_i32 = arith.constant 0 : i32
    %c0_i32_0 = arith.constant 0 : i32
    %c0_i32_1 = arith.constant 0 : i32
    return %c0_i32, %c0_i32_0 : i32, i32
  }
  func.func @transform_4(%arg0: i32, %arg1: i32) -> (i32, i32, i32, i32) {
    %c0_i32 = arith.constant 0 : i32
    %c0_i32_0 = arith.constant 0 : i32
    %c0_i32_1 = arith.constant 0 : i32
    return %arg1, %arg0, %c0_i32, %c0_i32_0 : i32, i32, i32, i32
  }
  func.func @transform_5(%arg0: i32, %arg1: i32) -> (i32, i32) {
    %c0_i32 = arith.constant 0 : i32
    %c0_i32_0 = arith.constant 0 : i32
    return %c0_i32, %arg0 : i32, i32
  }
}

</mosaic_0001>

<llo_original>
// kernel: tpu_custom_call.1
$region0: #{tpu_custom_call.1}
  #allocation0 [shape = 'u32[]', space=smem, size = 0x4, offset = 0x4, fixed_abs, tag = 'smem constant byte address 0x4 - core index']
  #allocation1 [shape = 'u32[144,128]{1,0:T(1,128)}', space=vmem, size = 0x12000, scoped, tag = 'internal scratch']
  %s0 = inlined_call_operand.hbm [shape: f32[2,4,16,16], index: 0, kind: input, shape index: {}]
  %s1 = inlined_call_operand.vmem [shape: f32[4,9], index: 1, kind: input, shape index: {}]
  %s2 = inlined_call_operand.vmem [shape: f32[16,8], index: 2, kind: input, shape index: {}]
  %s3 = inlined_call_operand.vmem [shape: f32[16,8], index: 3, kind: input, shape index: {}]
  %s4 = inlined_call_operand.hbm [shape: f32[2,4,8,8], index: 4, kind: output, shape index: {0}]
  %s5 = inlined_call_operand.hbm [shape: f32[2,4], index: 5, kind: output, shape index: {1}]
  %6 = xla_tuple %s4, %s5
  %s7 = sld [smem:[#allocation0]]
  $region65: #{tpu_custom_call.1} parent=0
    _
  %s9 = ssub.s32 1, %s7
  %s10 = scalar_select 0, %s9, %s7
  $region1: #{tpu_custom_call.1} parent=0
    #allocation2 [shape = 'u8[65536]{0}', space=vmem, size = 0x10000, scoped, tag = 'input window, operand 0']
    #allocation3 [shape = 's32[2]{0}', space=sflag, size = 0x8, scoped, tag = 'scoped memory for tpu_custom_call.1']
    #allocation4 [shape = 's32[2]{0}', space=sflag, size = 0x8, scoped, tag = 'scoped memory for tpu_custom_call.1']
    #allocation5 [shape = 'u8[32768]{0}', space=vmem, size = 0x8000, scoped, tag = 'output window, operand 0']
    #allocation6 [shape = 'u8[1024]{0}', space=vmem, size = 0x400, scoped, tag = 'output window, operand 1, single buffered']
    #allocation7 [shape = 's32[1]{0}', space=sflag, size = 0x4, scoped, tag = 'scoped memory for tpu_custom_call.1']
    %11 = vsyncpa [#allocation3], 0
    %s12 = scalar_lea.sflag [#allocation3], 1
    %13 = vsyncpa %s12, 0
    %14 = vsyncpa [#allocation4], 0
    %s15 = scalar_lea.sflag [#allocation4], 1
    %16 = vsyncpa %s15, 0
    %17 = vsyncpa [#allocation7], 0
    loop: start=0, step=1, limit=4
    $region2: #{tpu_custom_call.1} parent=1 // loop_pre_header
      _
    $region3: #{tpu_custom_call.1} parent=1 // loop_header
      %s19 = sphi 0, %s23
      %p20 = scmp.ge.s32.totalorder %s19, 4
      %s26 = sphi 0, %s38
      %s27 = sphi 0, %s34
      %s28 = sphi 0, %s26
      %s29 = sphi 0, %s27
      %s30 = sphi 0, %s28
      %s31 = sphi 0, %s29
      %s43 = sphi 0, %s45
      %s46 = sphi 0, %s43
      %s47 = sphi 0, %s46
      %s63 = sphi 0, %s47
      %s69 = sphi 0, %s71
      %s72 = sphi 0, %s69
      %s73 = sphi 0, %s72
      %s89 = sphi 0, %s73
      %s93 = sphi 0, %s93
      %s95 = sphi 0, %s93
      %s96 = sphi 0, %s95
      %s110 = sphi 0, %s96
      %s114 = sphi 0, %s114
      %s116 = sphi 0, %s114
      %s117 = sphi 0, %s116
      %s131 = sphi 0, %s117
      %s139 = sphi 0, %s141
      %s142 = sphi 0, %s139
      %s143 = sphi 0, %s142
      %s159 = sphi 0, %s143
      %s165 = sphi 0, %s167
      %s168 = sphi 0, %s165
      %s169 = sphi 0, %s168
      %s185 = sphi 0, %s169
    $region4: #{tpu_custom_call.1} parent=1 // loop_header_branch
      %22 = sbr.rel (%p20) target = $region8
    $region5: #{tpu_custom_call.1} parent=1 // loop_body
      %s24 = ssub.s32 %s19, 1
      %s25 = ssub.s32 %s19, 2
      %s32 = sadd.s32 1, %s27
      %p33 = scmp.ge.s32.totalorder %s32, 2
      %s34 = scalar_select %p33, 0, %s32
      %s35 = sadd.s32 1, %s26
      %s36 = scalar_select %p33, %s35, %s26
      %p37 = scmp.ge.s32.totalorder %s36, 1
      %s38 = scalar_select %p37, 0, %s36
      %s39 = ssub.s32 %s27, %s34
      %s40 = ssub.s32 %s26, %s38
      %s41 = sor.u32 %s39, %s40
      %p42 = scmp.eq.s32.totalorder %s41, 0
      %s44 = sadd.s32 %s43, 1
      %s45 = scalar_select %p42, %s43, %s44
      %p48 = pneg %p42
      %p49 = scmp.eq.s32.totalorder %s19, 1
      %p50 = por %p48, %p49
      %p51 = scmp.ne.s32.totalorder %s43, %s46
      %p52 = scmp.eq.s32.totalorder %s19, 0
      %p53 = por %p51, %p52
      %p54 = scmp.ne.s32.totalorder %s43, %s46
      %p55 = scmp.eq.s32.totalorder %s24, 1
      %p56 = por %p54, %p55
      %p57 = scmp.ne.s32.totalorder %s46, %s47
      %p58 = scmp.eq.s32.totalorder %s24, 0
      %p59 = por %p57, %p58
      %p60 = scmp.ne.s32.totalorder %s46, %s47
      %p61 = scmp.eq.s32.totalorder %s25, 1
      %p62 = por %p60, %p61
      %p64 = scmp.ne.s32.totalorder %s47, %s63
      %p65 = scmp.eq.s32.totalorder %s25, 0
      %p66 = por %p64, %p65
      %s67 = ssub.s32 %s26, %s38
      %p68 = scmp.eq.s32.totalorder %s67, 0
      %s70 = sadd.s32 %s69, 1
      %s71 = scalar_select %p68, %s69, %s70
      %p74 = pneg %p68
      %p75 = scmp.eq.s32.totalorder %s19, 1
      %p76 = por %p74, %p75
      %p77 = scmp.ne.s32.totalorder %s69, %s72
      %p78 = scmp.eq.s32.totalorder %s19, 0
      %p79 = por %p77, %p78
      %p80 = scmp.ne.s32.totalorder %s69, %s72
      %p81 = scmp.eq.s32.totalorder %s24, 1
      %p82 = por %p80, %p81
      %p83 = scmp.ne.s32.totalorder %s72, %s73
      %p84 = scmp.eq.s32.totalorder %s24, 0
      %p85 = por %p83, %p84
      %p86 = scmp.ne.s32.totalorder %s72, %s73
      %p87 = scmp.eq.s32.totalorder %s25, 1
      %p88 = por %p86, %p87
      %p90 = scmp.ne.s32.totalorder %s73, %s89
      %p91 = scmp.eq.s32.totalorder %s25, 0
      %p92 = por %p90, %p91
      %s94 = sadd.s32 %s93, 1
      %p97 = scmp.eq.s32.totalorder %s19, 1
      %p98 = scmp.ne.s32.totalorder %s93, %s95
      %p99 = scmp.eq.s32.totalorder %s19, 0
      %p100 = por %p98, %p99
      %p101 = scmp.ne.s32.totalorder %s93, %s95
      %p102 = scmp.eq.s32.totalorder %s24, 1
      %p103 = por %p101, %p102
      %p104 = scmp.ne.s32.totalorder %s95, %s96
      %p105 = scmp.eq.s32.totalorder %s24, 0
      %p106 = por %p104, %p105
      %p107 = scmp.ne.s32.totalorder %s95, %s96
      %p108 = scmp.eq.s32.totalorder %s25, 1
      %p109 = por %p107, %p108
      %p111 = scmp.ne.s32.totalorder %s96, %s110
      %p112 = scmp.eq.s32.totalorder %s25, 0
      %p113 = por %p111, %p112
      %s115 = sadd.s32 %s114, 1
      %p118 = scmp.eq.s32.totalorder %s19, 1
      %p119 = scmp.ne.s32.totalorder %s114, %s116
      %p120 = scmp.eq.s32.totalorder %s19, 0
      %p121 = por %p119, %p120
      %p122 = scmp.ne.s32.totalorder %s114, %s116
      %p123 = scmp.eq.s32.totalorder %s24, 1
      %p124 = por %p122, %p123
      %p125 = scmp.ne.s32.totalorder %s116, %s117
      %p126 = scmp.eq.s32.totalorder %s24, 0
      %p127 = por %p125, %p126
      %p128 = scmp.ne.s32.totalorder %s116, %s117
      %p129 = scmp.eq.s32.totalorder %s25, 1
      %p130 = por %p128, %p129
      %p132 = scmp.ne.s32.totalorder %s117, %s131
      %p133 = scmp.eq.s32.totalorder %s25, 0
      %p134 = por %p132, %p133
      %s135 = ssub.s32 %s27, %s34
      %s136 = ssub.s32 %s26, %s38
      %s137 = sor.u32 %s135, %s136
      %p138 = scmp.eq.s32.totalorder %s137, 0
      %s140 = sadd.s32 %s139, 1
      %s141 = scalar_select %p138, %s139, %s140
      %p144 = pneg %p138
      %p145 = scmp.eq.s32.totalorder %s19, 1
      %p146 = por %p144, %p145
      %p147 = scmp.ne.s32.totalorder %s139, %s142
      %p148 = scmp.eq.s32.totalorder %s19, 0
      %p149 = por %p147, %p148
      %p150 = scmp.ne.s32.totalorder %s139, %s142
      %p151 = scmp.eq.s32.totalorder %s24, 1
      %p152 = por %p150, %p151
      %p153 = scmp.ne.s32.totalorder %s142, %s143
      %p154 = scmp.eq.s32.totalorder %s24, 0
      %p155 = por %p153, %p154
      %p156 = scmp.ne.s32.totalorder %s142, %s143
      %p157 = scmp.eq.s32.totalorder %s25, 1
      %p158 = por %p156, %p157
      %p160 = scmp.ne.s32.totalorder %s143, %s159
      %p161 = scmp.eq.s32.totalorder %s25, 0
      %p162 = por %p160, %p161
      %s163 = ssub.s32 %s26, %s38
      %p164 = scmp.eq.s32.totalorder %s163, 0
      %s166 = sadd.s32 %s165, 1
      %s167 = scalar_select %p164, %s165, %s166
      %p170 = pneg %p164
      %p171 = scmp.eq.s32.totalorder %s19, 1
      %p172 = por %p170, %p171
      %p173 = scmp.ne.s32.totalorder %s165, %s168
      %p174 = scmp.eq.s32.totalorder %s19, 0
      %p175 = por %p173, %p174
      %p176 = scmp.ne.s32.totalorder %s165, %s168
      %p177 = scmp.eq.s32.totalorder %s24, 1
      %p178 = por %p176, %p177
      %p179 = scmp.ne.s32.totalorder %s168, %s169
      %p180 = scmp.eq.s32.totalorder %s24, 0
      %p181 = por %p179, %p180
      %p182 = scmp.ne.s32.totalorder %s168, %s169
      %p183 = scmp.eq.s32.totalorder %s25, 1
      %p184 = por %p182, %p183
      %p186 = scmp.ne.s32.totalorder %s169, %s185
      %p187 = scmp.eq.s32.totalorder %s25, 0
      %p188 = por %p186, %p187
      %p189 = scmp.le.s32.totalorder 1, %s19
      %p190 = scmp.lt.s32.totalorder %s19, 3
      %p191 = pnand %p189, %p190
      %p192 = pneg %p191
      // Predicated region
      $region9: #{tpu_custom_call.1} parent=5 // pred_check
        _
      $region10: #{tpu_custom_call.1} parent=5 // pred_check_branch
        %194 = sbr.rel (%p191) target = $region12
      $region11: #{tpu_custom_call.1} parent=5 // pred_region
        %s195 = ssub.s32 %s19, 1
        // Predicated region
        $region13: #{tpu_custom_call.1} parent=11 // pred_check
          %p196 = pneg %p85
        $region14: #{tpu_custom_call.1} parent=11 // pred_check_branch
          %198 = sbr.rel (%p196) target = $region16
        $region15: #{tpu_custom_call.1} parent=11 // pred_region
          %p199 = scmp.lt.s32.totalorder %s28, 0
          %s200 = scalar_select %p199, %s28, 0
          %s201 = smul.addr %s200, 4
          %s202 = scalar_lea.vmem %s1, %s201
        $region16: #{tpu_custom_call.1} parent=11 // pred_fallthru
          _
        // Predicated region
        $region17: #{tpu_custom_call.1} parent=11 // pred_check
          %p203 = pneg %p106
        $region18: #{tpu_custom_call.1} parent=11 // pred_check_branch
          %205 = sbr.rel (%p203) target = $region20
        $region19: #{tpu_custom_call.1} parent=11 // pred_region
          _
        $region20: #{tpu_custom_call.1} parent=11 // pred_fallthru
          _
        // Predicated region
        $region21: #{tpu_custom_call.1} parent=11 // pred_check
          %p206 = pneg %p127
        $region22: #{tpu_custom_call.1} parent=11 // pred_check_branch
          %208 = sbr.rel (%p206) target = $region24
        $region23: #{tpu_custom_call.1} parent=11 // pred_region
          _
        $region24: #{tpu_custom_call.1} parent=11 // pred_fallthru
          _
      $region12: #{tpu_custom_call.1} parent=5 // pred_fallthru
        _
      %p209 = scmp.lt.s32.totalorder %s19, 2
      // Predicated region
      $region25: #{tpu_custom_call.1} parent=5 // pred_check
        %p210 = pneg %p209
      $region26: #{tpu_custom_call.1} parent=5 // pred_check_branch
        %212 = sbr.rel (%p210) target = $region28
      $region27: #{tpu_custom_call.1} parent=5 // pred_region
        // Predicated region
        $region29: #{tpu_custom_call.1} parent=27 // pred_check
          %p213 = pneg %p53
        $region30: #{tpu_custom_call.1} parent=27 // pred_check_branch
          %215 = sbr.rel (%p213) target = $region32
        $region31: #{tpu_custom_call.1} parent=27 // pred_region
          %s216 = sand.u32 %s43, 1
          %s217 = scalar_lea.sflag [#allocation3], %s216
          %s218 = sand.u32 %s43, 1
          %s219 = smul.addr %s218, 64
          %s220 = scalar_lea.vmem [#allocation2], %s219
          %s221 = smul.u32 4, %s26
          %s223 = ssub.s32 1024, 1024
          %224 = vsyncadd %s217, %s223
          %s225 = smul.addr %s221, 2
          %s226 = smul.addr %s27, 8
          %s227 = sadd.s32 %s225, %s226
          %s228 = smul.addr %s227, 128
          %s229 = scalar_lea.hbm %s0, %s228
          %s230 = sshll.u32 %s220, 4
          %s231 = int_to_ptr.vmem [resolvable:$true] %s230
          %236 = dma.hbm_to_vmem [thread:$0]  %s229, 1024, %s231, %s217, 128, 128, 8
        $region32: #{tpu_custom_call.1} parent=27 // pred_fallthru
          _
      $region28: #{tpu_custom_call.1} parent=5 // pred_fallthru
        _
      %p237 = scmp.le.s32.totalorder 1, %s19
      %p238 = scmp.lt.s32.totalorder %s19, 3
      %p239 = pnand %p237, %p238
      %p240 = pneg %p239
      // Predicated region
      $region33: #{tpu_custom_call.1} parent=5 // pred_check
        _
      $region34: #{tpu_custom_call.1} parent=5 // pred_check_branch
        %242 = sbr.rel (%p239) target = $region36
      $region35: #{tpu_custom_call.1} parent=5 // pred_region
        %s243 = ssub.s32 %s19, 1
        %s244 = sand.u32 %s46, 1
        %s245 = scalar_lea.sflag [#allocation3], %s244
        %s246 = sand.u32 %s46, 1
        %s247 = smul.addr %s246, 64
        %s248 = scalar_lea.vmem [#allocation2], %s247
        // Predicated region
        $region37: #{tpu_custom_call.1} parent=35 // pred_check
          %p249 = pneg %p59
        $region38: #{tpu_custom_call.1} parent=35 // pred_check_branch
          %251 = sbr.rel (%p249) target = $region40
        $region39: #{tpu_custom_call.1} parent=35 // pred_region
          %252 = dma.done %s245, 1024
        $region40: #{tpu_custom_call.1} parent=35 // pred_fallthru
          _
        %s253 = sand.u32 %s46, 1
        %s254 = scalar_lea.sflag [#allocation3], %s253
        %s255 = sand.u32 %s46, 1
        %s256 = smul.addr %s255, 64
        %s257 = scalar_lea.vmem [#allocation2], %s256
        %p258 = pneg %p59
        %p259 = pneg %p56
        %p260 = scmp.lt.s32.totalorder %s28, 0
        %s261 = scalar_select %p260, %s28, 0
        %s262 = smul.addr %s261, 4
        %s263 = scalar_lea.vmem %s1, %s262
        %p264 = pneg %p85
        %p265 = pneg %p82
        %p266 = pneg %p106
        %p267 = pneg %p103
        %p268 = pneg %p127
        %p269 = pneg %p124
        %p270 = pneg %p155
        %p271 = pneg %p152
        %s272 = sand.u32 %s142, 1
        %s273 = scalar_lea.sflag [#allocation4], %s272
        %s274 = sand.u32 %s142, 1
        %s275 = smul.addr %s274, 32
        %s276 = scalar_lea.vmem [#allocation5], %s275
        %p277 = pneg %p181
        %p278 = pneg %p178
        %s279 = smul.u32 4, %s28
        %p280 = scmp.lt.s32.totalorder %s28, 0
        %s281 = scalar_select %p280, %s28, 0
        %s282 = smul.addr %s281, 4
        %s283 = scalar_lea.vmem %s1, %s282
        %s284 = smul.u32 4, %s28
        %v285 = vld [vmem:[%s2] sm:$0xff]
        %v286 = vld [vmem:[%s2 + $0x8] sm:$0xff]
        %v287 = vld [vmem:[%s3] sm:$0xff]
        %v288 = vld [vmem:[%s3 + $0x8] sm:$0xff]
        %p289 = scmp.eq.s32.totalorder %s29, 0
        // Predicated region
        $region41: #{tpu_custom_call.1} parent=35 // pred_check
          %p290 = pneg %p289
        $region42: #{tpu_custom_call.1} parent=35 // pred_check_branch
          %292 = sbr.rel (%p290) target = $region44
        $region43: #{tpu_custom_call.1} parent=35 // pred_region
          %vm293 = vcmask 25600
          %294 = vst.msk [vmem:[#allocation6] sm:$0x3] %vm293, 0.0
        $region44: #{tpu_custom_call.1} parent=35 // pred_fallthru
          _
        %v295 = vld [vmem:[%s248] sm:$0xff]
        %v296 = vld [vmem:[%s248 + $0x8] sm:$0xff]
        %v297 = vld [vmem:[%s248 + $0x10] sm:$0xff]
        %v298 = vld [vmem:[%s248 + $0x18] sm:$0xff]
        %v299 = vld [vmem:[%s248 + $0x20] sm:$0xff]
        %v300 = vld [vmem:[%s248 + $0x28] sm:$0xff]
        %v301 = vld [vmem:[%s248 + $0x30] sm:$0xff]
        %v302 = vld [vmem:[%s248 + $0x38] sm:$0xff]
        %v303 = vld [vmem:[%s283] sm:$0xf]
        %312 = vrot.lane.b32.xlu0 %v295, 1
        %v313 = vpop.permute.xlu0 %312
        %314 = vrot.lane.b32.xlu0 %v296, 1
        %v315 = vpop.permute.xlu0 %314
        %316 = vrot.lane.b32.xlu0 %v297, 1
        %v317 = vpop.permute.xlu0 %316
        %318 = vrot.lane.b32.xlu0 %v298, 1
        %v319 = vpop.permute.xlu0 %318
        %320 = vrot.lane.b32.xlu0 %v299, 1
        %v321 = vpop.permute.xlu0 %320
        %322 = vrot.lane.b32.xlu0 %v300, 1
        %v323 = vpop.permute.xlu0 %322
        %324 = vrot.lane.b32.xlu0 %v301, 1
        %v325 = vpop.permute.xlu0 %324
        %326 = vrot.lane.b32.xlu0 %v302, 1
        %v327 = vpop.permute.xlu0 %326
        %vm336 = vcmask 7168
        %v337 = vsel %vm336, 0.0, %v313
        %v338 = vsel %vm336, 0.0, %v315
        %v339 = vsel %vm336, 0.0, %v317
        %v340 = vsel %vm336, 0.0, %v319
        %v341 = vsel %vm336, 0.0, %v321
        %v342 = vsel %vm336, 0.0, %v323
        %v343 = vsel %vm336, 0.0, %v325
        %v344 = vsel %vm336, 0.0, %v327
        %345 = vrot.lane.b32.xlu0 %v295, 127
        %v346 = vpop.permute.xlu0 %345
        %347 = vrot.lane.b32.xlu0 %v296, 127
        %v348 = vpop.permute.xlu0 %347
        %349 = vrot.lane.b32.xlu0 %v297, 127
        %v350 = vpop.permute.xlu0 %349
        %351 = vrot.lane.b32.xlu0 %v298, 127
        %v352 = vpop.permute.xlu0 %351
        %353 = vrot.lane.b32.xlu0 %v299, 127
        %v354 = vpop.permute.xlu0 %353
        %355 = vrot.lane.b32.xlu0 %v300, 127
        %v356 = vpop.permute.xlu0 %355
        %357 = vrot.lane.b32.xlu0 %v301, 127
        %v358 = vpop.permute.xlu0 %357
        %359 = vrot.lane.b32.xlu0 %v302, 127
        %v360 = vpop.permute.xlu0 %359
        %vm369 = vcmask 121856
        %v370 = vsel %vm369, %v346, 0.0
        %v371 = vsel %vm369, %v348, 0.0
        %v372 = vsel %vm369, %v350, 0.0
        %v373 = vsel %vm369, %v352, 0.0
        %v374 = vsel %vm369, %v354, 0.0
        %v375 = vsel %vm369, %v356, 0.0
        %v376 = vsel %vm369, %v358, 0.0
        %v377 = vsel %vm369, %v360, 0.0
        %v380 = vunpack.c.l.s4 1966171168
        %v381 = vunpack.c.0.s8 %v380
        %v382 = vlaneseq
        %v383 = vshrl.u32 %v382, 7
        %v384 = vsub.s32 %v381, %v383
        %v385 = vrot.slane %v303, %v384
        %v386 = vcombine.high %v385, %v385
        %v388 = vunpack.c.l.s4 1966171168
        %v389 = vunpack.c.0.s8 %v388
        %v390 = vlaneseq
        %v391 = vshrl.u32 %v390, 7
        %v392 = vsub.s32 %v389, %v391
        %v393 = vrot.slane %v385, %v392
        %v395 = vunpack.c.l.s4 1966171168
        %v396 = vunpack.c.0.s8 %v395
        %v397 = vlaneseq
        %v398 = vshrl.u32 %v397, 7
        %v399 = vsub.s32 %v396, %v398
        %v400 = vrot.slane %v386, %v399
        %v401 = vcombine.high %v393, %v393
        %v402 = vcombine.high %v400, %v400
        %v403 = vlaneseq
        %v404 = vshrl.u32 %v403, 7
        %v405 = vsub.s32 0, %v404
        %v406 = vrot.slane %v393, %v405
        %v407 = vlaneseq
        %v408 = vshrl.u32 %v407, 7
        %v409 = vsub.s32 0, %v408
        %v410 = vrot.slane %v400, %v409
        %v411 = vlaneseq
        %v412 = vshrl.u32 %v411, 7
        %v413 = vsub.s32 0, %v412
        %v414 = vrot.slane %v401, %v413
        %v415 = vlaneseq
        %v416 = vshrl.u32 %v415, 7
        %v417 = vsub.s32 0, %v416
        %v418 = vrot.slane %v402, %v417
        %419 = vset.pattern.permute.xlu0 0
        %420 = vperm.xlu0 %419, %v406
        %v421 = vpop.permute.xlu0 %420
        %423 = vset.pattern.permute.xlu0 0
        %424 = vperm.xlu0 %423, %v410
        %v425 = vpop.permute.xlu0 %424
        %427 = vset.pattern.permute.xlu0 0
        %428 = vperm.xlu0 %427, %v414
        %v429 = vpop.permute.xlu0 %428
        %431 = vset.pattern.permute.xlu0 0
        %432 = vperm.xlu0 %431, %v418
        %v433 = vpop.permute.xlu0 %432
        %v435 = vmul.f32 %v421, %v337
        %v436 = vmul.f32 %v421, %v338
        %v437 = vmul.f32 %v425, %v339
        %v438 = vmul.f32 %v425, %v340
        %v439 = vmul.f32 %v429, %v341
        %v440 = vmul.f32 %v429, %v342
        %v441 = vmul.f32 %v433, %v343
        %v442 = vmul.f32 %v433, %v344
        %v443 = vadd.f32 %v435, 0.0
        %v444 = vadd.f32 %v436, 0.0
        %v445 = vadd.f32 %v437, 0.0
        %v446 = vadd.f32 %v438, 0.0
        %v447 = vadd.f32 %v439, 0.0
        %v448 = vadd.f32 %v440, 0.0
        %v449 = vadd.f32 %v441, 0.0
        %v450 = vadd.f32 %v442, 0.0
        %451 = vset.pattern.permute.xlu0 1
        %452 = vperm.xlu0 %451, %v406
        %v453 = vpop.permute.xlu0 %452
        %455 = vset.pattern.permute.xlu0 1
        %456 = vperm.xlu0 %455, %v410
        %v457 = vpop.permute.xlu0 %456
        %459 = vset.pattern.permute.xlu0 1
        %460 = vperm.xlu0 %459, %v414
        %v461 = vpop.permute.xlu0 %460
        %463 = vset.pattern.permute.xlu0 1
        %464 = vperm.xlu0 %463, %v418
        %v465 = vpop.permute.xlu0 %464
        %v467 = vmul.f32 %v453, %v295
        %v468 = vmul.f32 %v453, %v296
        %v469 = vmul.f32 %v457, %v297
        %v470 = vmul.f32 %v457, %v298
        %v471 = vmul.f32 %v461, %v299
        %v472 = vmul.f32 %v461, %v300
        %v473 = vmul.f32 %v465, %v301
        %v474 = vmul.f32 %v465, %v302
        %v475 = vadd.f32 %v443, %v467
        %v476 = vadd.f32 %v444, %v468
        %v477 = vadd.f32 %v445, %v469
        %v478 = vadd.f32 %v446, %v470
        %v479 = vadd.f32 %v447, %v471
        %v480 = vadd.f32 %v448, %v472
        %v481 = vadd.f32 %v449, %v473
        %v482 = vadd.f32 %v450, %v474
        %483 = vset.pattern.permute.xlu0 2
        %484 = vperm.xlu0 %483, %v406
        %v485 = vpop.permute.xlu0 %484
        %487 = vset.pattern.permute.xlu0 2
        %488 = vperm.xlu0 %487, %v410
        %v489 = vpop.permute.xlu0 %488
        %491 = vset.pattern.permute.xlu0 2
        %492 = vperm.xlu0 %491, %v414
        %v493 = vpop.permute.xlu0 %492
        %495 = vset.pattern.permute.xlu0 2
        %496 = vperm.xlu0 %495, %v418
        %v497 = vpop.permute.xlu0 %496
        %v499 = vmul.f32 %v485, %v370
        %v500 = vmul.f32 %v485, %v371
        %v501 = vmul.f32 %v489, %v372
        %v502 = vmul.f32 %v489, %v373
        %v503 = vmul.f32 %v493, %v374
        %v504 = vmul.f32 %v493, %v375
        %v505 = vmul.f32 %v497, %v376
        %v506 = vmul.f32 %v497, %v377
        %v507 = vadd.f32 %v475, %v499
        %v508 = vadd.f32 %v476, %v500
        %v509 = vadd.f32 %v477, %v501
        %v510 = vadd.f32 %v478, %v502
        %v511 = vadd.f32 %v479, %v503
        %v512 = vadd.f32 %v480, %v504
        %v513 = vadd.f32 %v481, %v505
        %v514 = vadd.f32 %v482, %v506
        %vm523 = vcmask 1040384
        %v524 = vrot.slane %v507, 7
        %v525 = vrot.slane %v508, 7
        %v526 = vsel %vm523, %v524, %v525
        %v527 = vrot.slane %v509, 7
        %v528 = vrot.slane %v510, 7
        %v529 = vsel %vm523, %v527, %v528
        %v530 = vrot.slane %v511, 7
        %v531 = vrot.slane %v512, 7
        %v532 = vsel %vm523, %v530, %v531
        %v533 = vrot.slane %v513, 7
        %v534 = vrot.slane %v514, 7
        %v535 = vsel %vm523, %v533, %v534
        %v544 = vsel %vm523, 0.0, %v524
        %v545 = vsel %vm523, 0.0, %v527
        %v546 = vsel %vm523, 0.0, %v530
        %v547 = vsel %vm523, 0.0, %v533
        %v548 = vadd.f32 %v544, 0.0
        %v549 = vadd.f32 %v526, 0.0
        %v550 = vadd.f32 %v545, 0.0
        %v551 = vadd.f32 %v529, 0.0
        %v552 = vadd.f32 %v546, 0.0
        %v553 = vadd.f32 %v532, 0.0
        %v554 = vadd.f32 %v547, 0.0
        %v555 = vadd.f32 %v535, 0.0
        %556 = vset.pattern.permute.xlu0 3
        %557 = vperm.xlu0 %556, %v406
        %v558 = vpop.permute.xlu0 %557
        %560 = vset.pattern.permute.xlu0 3
        %561 = vperm.xlu0 %560, %v410
        %v562 = vpop.permute.xlu0 %561
        %564 = vset.pattern.permute.xlu0 3
        %565 = vperm.xlu0 %564, %v414
        %v566 = vpop.permute.xlu0 %565
        %568 = vset.pattern.permute.xlu0 3
        %569 = vperm.xlu0 %568, %v418
        %v570 = vpop.permute.xlu0 %569
        %v572 = vmul.f32 %v558, %v337
        %v573 = vmul.f32 %v558, %v338
        %v574 = vmul.f32 %v562, %v339
        %v575 = vmul.f32 %v562, %v340
        %v576 = vmul.f32 %v566, %v341
        %v577 = vmul.f32 %v566, %v342
        %v578 = vmul.f32 %v570, %v343
        %v579 = vmul.f32 %v570, %v344
        %v580 = vadd.f32 %v572, 0.0
        %v581 = vadd.f32 %v573, 0.0
        %v582 = vadd.f32 %v574, 0.0
        %v583 = vadd.f32 %v575, 0.0
        %v584 = vadd.f32 %v576, 0.0
        %v585 = vadd.f32 %v577, 0.0
        %v586 = vadd.f32 %v578, 0.0
        %v587 = vadd.f32 %v579, 0.0
        %588 = vset.pattern.permute.xlu0 4
        %589 = vperm.xlu0 %588, %v406
        %v590 = vpop.permute.xlu0 %589
        %592 = vset.pattern.permute.xlu0 4
        %593 = vperm.xlu0 %592, %v410
        %v594 = vpop.permute.xlu0 %593
        %596 = vset.pattern.permute.xlu0 4
        %597 = vperm.xlu0 %596, %v414
        %v598 = vpop.permute.xlu0 %597
        %600 = vset.pattern.permute.xlu0 4
        %601 = vperm.xlu0 %600, %v418
        %v602 = vpop.permute.xlu0 %601
        %v604 = vmul.f32 %v590, %v295
        %v605 = vmul.f32 %v590, %v296
        %v606 = vmul.f32 %v594, %v297
        %v607 = vmul.f32 %v594, %v298
        %v608 = vmul.f32 %v598, %v299
        %v609 = vmul.f32 %v598, %v300
        %v610 = vmul.f32 %v602, %v301
        %v611 = vmul.f32 %v602, %v302
        %v612 = vadd.f32 %v580, %v604
        %v613 = vadd.f32 %v581, %v605
        %v614 = vadd.f32 %v582, %v606
        %v615 = vadd.f32 %v583, %v607
        %v616 = vadd.f32 %v584, %v608
        %v617 = vadd.f32 %v585, %v609
        %v618 = vadd.f32 %v586, %v610
        %v619 = vadd.f32 %v587, %v611
        %620 = vset.pattern.permute.xlu0 5
        %621 = vperm.xlu0 %620, %v406
        %v622 = vpop.permute.xlu0 %621
        %624 = vset.pattern.permute.xlu0 5
        %625 = vperm.xlu0 %624, %v410
        %v626 = vpop.permute.xlu0 %625
        %628 = vset.pattern.permute.xlu0 5
        %629 = vperm.xlu0 %628, %v414
        %v630 = vpop.permute.xlu0 %629
        %632 = vset.pattern.permute.xlu0 5
        %633 = vperm.xlu0 %632, %v418
        %v634 = vpop.permute.xlu0 %633
        %v636 = vmul.f32 %v622, %v370
        %v637 = vmul.f32 %v622, %v371
        %v638 = vmul.f32 %v626, %v372
        %v639 = vmul.f32 %v626, %v373
        %v640 = vmul.f32 %v630, %v374
        %v641 = vmul.f32 %v630, %v375
        %v642 = vmul.f32 %v634, %v376
        %v643 = vmul.f32 %v634, %v377
        %v644 = vadd.f32 %v612, %v636
        %v645 = vadd.f32 %v613, %v637
        %v646 = vadd.f32 %v614, %v638
        %v647 = vadd.f32 %v615, %v639
        %v648 = vadd.f32 %v616, %v640
        %v649 = vadd.f32 %v617, %v641
        %v650 = vadd.f32 %v618, %v642
        %v651 = vadd.f32 %v619, %v643
        %v652 = vadd.f32 %v548, %v644
        %v653 = vadd.f32 %v549, %v645
        %v654 = vadd.f32 %v550, %v646
        %v655 = vadd.f32 %v551, %v647
        %v656 = vadd.f32 %v552, %v648
        %v657 = vadd.f32 %v553, %v649
        %v658 = vadd.f32 %v554, %v650
        %v659 = vadd.f32 %v555, %v651
        %660 = vset.pattern.permute.xlu0 6
        %661 = vperm.xlu0 %660, %v406
        %v662 = vpop.permute.xlu0 %661
        %664 = vset.pattern.permute.xlu0 6
        %665 = vperm.xlu0 %664, %v410
        %v666 = vpop.permute.xlu0 %665
        %668 = vset.pattern.permute.xlu0 6
        %669 = vperm.xlu0 %668, %v414
        %v670 = vpop.permute.xlu0 %669
        %672 = vset.pattern.permute.xlu0 6
        %673 = vperm.xlu0 %672, %v418
        %v674 = vpop.permute.xlu0 %673
        %v676 = vmul.f32 %v662, %v337
        %v677 = vmul.f32 %v662, %v338
        %v678 = vmul.f32 %v666, %v339
        %v679 = vmul.f32 %v666, %v340
        %v680 = vmul.f32 %v670, %v341
        %v681 = vmul.f32 %v670, %v342
        %v682 = vmul.f32 %v674, %v343
        %v683 = vmul.f32 %v674, %v344
        %v684 = vadd.f32 %v676, 0.0
        %v685 = vadd.f32 %v677, 0.0
        %v686 = vadd.f32 %v678, 0.0
        %v687 = vadd.f32 %v679, 0.0
        %v688 = vadd.f32 %v680, 0.0
        %v689 = vadd.f32 %v681, 0.0
        %v690 = vadd.f32 %v682, 0.0
        %v691 = vadd.f32 %v683, 0.0
        %692 = vset.pattern.permute.xlu0 7
        %693 = vperm.xlu0 %692, %v406
        %v694 = vpop.permute.xlu0 %693
        %696 = vset.pattern.permute.xlu0 7
        %697 = vperm.xlu0 %696, %v410
        %v698 = vpop.permute.xlu0 %697
        %700 = vset.pattern.permute.xlu0 7
        %701 = vperm.xlu0 %700, %v414
        %v702 = vpop.permute.xlu0 %701
        %704 = vset.pattern.permute.xlu0 7
        %705 = vperm.xlu0 %704, %v418
        %v706 = vpop.permute.xlu0 %705
        %v708 = vmul.f32 %v694, %v295
        %v709 = vmul.f32 %v694, %v296
        %v710 = vmul.f32 %v698, %v297
        %v711 = vmul.f32 %v698, %v298
        %v712 = vmul.f32 %v702, %v299
        %v713 = vmul.f32 %v702, %v300
        %v714 = vmul.f32 %v706, %v301
        %v715 = vmul.f32 %v706, %v302
        %v716 = vadd.f32 %v684, %v708
        %v717 = vadd.f32 %v685, %v709
        %v718 = vadd.f32 %v686, %v710
        %v719 = vadd.f32 %v687, %v711
        %v720 = vadd.f32 %v688, %v712
        %v721 = vadd.f32 %v689, %v713
        %v722 = vadd.f32 %v690, %v714
        %v723 = vadd.f32 %v691, %v715
        %724 = vset.pattern.permute.xlu0 8
        %725 = vperm.xlu0 %724, %v406
        %v726 = vpop.permute.xlu0 %725
        %728 = vset.pattern.permute.xlu0 8
        %729 = vperm.xlu0 %728, %v410
        %v730 = vpop.permute.xlu0 %729
        %732 = vset.pattern.permute.xlu0 8
        %733 = vperm.xlu0 %732, %v414
        %v734 = vpop.permute.xlu0 %733
        %736 = vset.pattern.permute.xlu0 8
        %737 = vperm.xlu0 %736, %v418
        %v738 = vpop.permute.xlu0 %737
        %v740 = vmul.f32 %v726, %v370
        %v741 = vmul.f32 %v726, %v371
        %v742 = vmul.f32 %v730, %v372
        %v743 = vmul.f32 %v730, %v373
        %v744 = vmul.f32 %v734, %v374
        %v745 = vmul.f32 %v734, %v375
        %v746 = vmul.f32 %v738, %v376
        %v747 = vmul.f32 %v738, %v377
        %v748 = vadd.f32 %v716, %v740
        %v749 = vadd.f32 %v717, %v741
        %v750 = vadd.f32 %v718, %v742
        %v751 = vadd.f32 %v719, %v743
        %v752 = vadd.f32 %v720, %v744
        %v753 = vadd.f32 %v721, %v745
        %v754 = vadd.f32 %v722, %v746
        %v755 = vadd.f32 %v723, %v747
        %vm764 = vcmask 1046528
        %v765 = vrot.slane %v748, 1
        %v766 = vrot.slane %v749, 1
        %v767 = vsel %vm764, %v765, %v766
        %v768 = vrot.slane %v750, 1
        %v769 = vrot.slane %v751, 1
        %v770 = vsel %vm764, %v768, %v769
        %v771 = vrot.slane %v752, 1
        %v772 = vrot.slane %v753, 1
        %v773 = vsel %vm764, %v771, %v772
        %v774 = vrot.slane %v754, 1
        %v775 = vrot.slane %v755, 1
        %v776 = vsel %vm764, %v774, %v775
        %v785 = vsel %vm764, %v766, 0.0
        %v786 = vsel %vm764, %v769, 0.0
        %v787 = vsel %vm764, %v772, 0.0
        %v788 = vsel %vm764, %v775, 0.0
        %v789 = vadd.f32 %v652, %v767
        %v790 = vadd.f32 %v653, %v785
        %v791 = vadd.f32 %v654, %v770
        %v792 = vadd.f32 %v655, %v786
        %v793 = vadd.f32 %v656, %v773
        %v794 = vadd.f32 %v657, %v787
        %v795 = vadd.f32 %v658, %v776
        %v796 = vadd.f32 %v659, %v788
        %vm797 = vcmask 130048
        %v799 = vsel %vm797, %v789, 0
        %v802 = vsel %vm797, %v790, 0
        %v805 = vsel %vm797, %v791, 0
        %v808 = vsel %vm797, %v792, 0
        %v811 = vsel %vm797, %v793, 0
        %v814 = vsel %vm797, %v794, 0
        %v817 = vsel %vm797, %v795, 0
        %v820 = vsel %vm797, %v796, 0
        %822 = vmatprep.subr.mxu0 0.0
        %823 = vmatpush1.msra.mxu0 0.0
        %824 = vmatprep.subr.mxu0 0.0
        %825 = vmatpush1.msra.mxu0 0.0
        %826 = vmatprep.subr.mxu0 0.0
        %827 = vmatpush1.msra.mxu0 0.0
        %828 = vmatprep.subr.mxu0 0.0
        %829 = vmatpush1.msra.mxu0 0.0
        %830 = vmatprep.subr.mxu0 0.0
        %831 = vmatpush1.msra.mxu0 0.0
        %832 = vmatprep.subr.mxu0 0.0
        %833 = vmatpush1.msra.mxu0 0.0
        %834 = vmatprep.subr.mxu0 0.0
        %835 = vmatpush1.msra.mxu0 0.0
        %836 = vmatprep.subr.mxu0 0.0
        %837 = vmatpush1.msra.mxu0 0.0
        %838 = vmatprep.subr.mxu0 0.0
        %839 = vmatpush1.msra.mxu0 0.0
        %840 = vmatprep.subr.mxu0 0.0
        %841 = vmatpush1.msra.mxu0 0.0
        %842 = vmatprep.subr.mxu0 0.0
        %843 = vmatpush1.msra.mxu0 0.0
        %844 = vmatprep.subr.mxu0 0.0
        %845 = vmatpush1.msra.mxu0 0.0
        %846 = vmatprep.subr.mxu0 0.0
        %847 = vmatpush1.msra.mxu0 0.0
        %848 = vmatprep.subr.mxu0 0.0
        %849 = vmatpush1.msra.mxu0 0.0
        %850 = vmatprep.subr.mxu0 0.0
        %v851 = vand.u32 %v286, 4294901760
        %852 = vmatpush1.msra.mxu0 %v851
        %853 = vmatprep.subr.mxu0 0.0
        %v854 = vand.u32 %v285, 4294901760
        %855 = vmatpush1.msra.mxu0 %v854
        %856 = vmatprep.subr.mxu0 0.0
        %857 = vmatpush2.msra.mxu0 0.0
        %858 = vmatprep.subr.mxu0 0.0
        %859 = vmatpush2.msra.mxu0 0.0
        %860 = vmatprep.subr.mxu0 0.0
        %861 = vmatpush2.msra.mxu0 0.0
        %862 = vmatprep.subr.mxu0 0.0
        %863 = vmatpush2.msra.mxu0 0.0
        %864 = vmatprep.subr.mxu0 0.0
        %865 = vmatpush2.msra.mxu0 0.0
        %866 = vmatprep.subr.mxu0 0.0
        %867 = vmatpush2.msra.mxu0 0.0
        %868 = vmatprep.subr.mxu0 0.0
        %869 = vmatpush2.msra.mxu0 0.0
        %870 = vmatprep.subr.mxu0 0.0
        %871 = vmatpush2.msra.mxu0 0.0
        %872 = vmatprep.subr.mxu0 0.0
        %873 = vmatpush2.msra.mxu0 0.0
        %874 = vmatprep.subr.mxu0 0.0
        %875 = vmatpush2.msra.mxu0 0.0
        %876 = vmatprep.subr.mxu0 0.0
        %877 = vmatpush2.msra.mxu0 0.0
        %878 = vmatprep.subr.mxu0 0.0
        %879 = vmatpush2.msra.mxu0 0.0
        %880 = vmatprep.subr.mxu0 0.0
        %881 = vmatpush2.msra.mxu0 0.0
        %882 = vmatprep.subr.mxu0 0.0
        %883 = vmatpush2.msra.mxu0 0.0
        %884 = vmatprep.subr.mxu0 0.0
        %885 = vmatpush2.msra.mxu0 0.0
        %886 = vmatprep.subr.mxu0 0.0
        %887 = vmatpush2.msra.mxu0 0.0
        %888 = vmatprep.mubr.f32.mxu0 0.0
        %v889 = vand.u32 %v799, 4294901760
        %v890 = vsub.f32 %v799, %v889
        %v891 = vand.u32 %v890, 4294901760
        %v892 = vsub.f32 %v890, %v891
        %v893 = vand.u32 %v892, 4294901760
        %894 = vmatmul.mubr.f32.gmra.mxu0 %v893
        %v895 = vpop.f32.mrf.mxu0
        %v896 = vadd.f32 0.0, %v895
        %v897 = vpop.f32.mrf.mxu0
        %898 = vmatprep.mubr.f32.mxu0 0.0
        %v899 = vand.u32 %v802, 4294901760
        %v900 = vsub.f32 %v802, %v899
        %v901 = vand.u32 %v900, 4294901760
        %v902 = vsub.f32 %v900, %v901
        %v903 = vand.u32 %v902, 4294901760
        %904 = vmatmul.mubr.f32.gmra.mxu0 %v903
        %v905 = vpop.f32.mrf.mxu0
        %v906 = vadd.f32 0.0, %v905
        %v907 = vpop.f32.mrf.mxu0
        %908 = vmatprep.mubr.f32.mxu0 0.0
        %v909 = vand.u32 %v805, 4294901760
        %v910 = vsub.f32 %v805, %v909
        %v911 = vand.u32 %v910, 4294901760
        %v912 = vsub.f32 %v910, %v911
        %v913 = vand.u32 %v912, 4294901760
        %914 = vmatmul.mubr.f32.gmra.mxu0 %v913
        %v915 = vpop.f32.mrf.mxu0
        %v916 = vadd.f32 0.0, %v915
        %v917 = vpop.f32.mrf.mxu0
        %918 = vmatprep.mubr.f32.mxu0 0.0
        %v919 = vand.u32 %v808, 4294901760
        %v920 = vsub.f32 %v808, %v919
        %v921 = vand.u32 %v920, 4294901760
        %v922 = vsub.f32 %v920, %v921
        %v923 = vand.u32 %v922, 4294901760
        %924 = vmatmul.mubr.f32.gmra.mxu0 %v923
        %v925 = vpop.f32.mrf.mxu0
        %v926 = vadd.f32 0.0, %v925
        %v927 = vpop.f32.mrf.mxu0
        %928 = vmatprep.mubr.f32.mxu0 0.0
        %v929 = vand.u32 %v811, 4294901760
        %v930 = vsub.f32 %v811, %v929
        %v931 = vand.u32 %v930, 4294901760
        %v932 = vsub.f32 %v930, %v931
        %v933 = vand.u32 %v932, 4294901760
        %934 = vmatmul.mubr.f32.gmra.mxu0 %v933
        %v935 = vpop.f32.mrf.mxu0
        %v936 = vadd.f32 0.0, %v935
        %v937 = vpop.f32.mrf.mxu0
        %938 = vmatprep.mubr.f32.mxu0 0.0
        %v939 = vand.u32 %v814, 4294901760
        %v940 = vsub.f32 %v814, %v939
        %v941 = vand.u32 %v940, 4294901760
        %v942 = vsub.f32 %v940, %v941
        %v943 = vand.u32 %v942, 4294901760
        %944 = vmatmul.mubr.f32.gmra.mxu0 %v943
        %v945 = vpop.f32.mrf.mxu0
        %v946 = vadd.f32 0.0, %v945
        %v947 = vpop.f32.mrf.mxu0
        %948 = vmatprep.mubr.f32.mxu0 0.0
        %v949 = vand.u32 %v817, 4294901760
        %v950 = vsub.f32 %v817, %v949
        %v951 = vand.u32 %v950, 4294901760
        %v952 = vsub.f32 %v950, %v951
        %v953 = vand.u32 %v952, 4294901760
        %954 = vmatmul.mubr.f32.gmra.mxu0 %v953
        %v955 = vpop.f32.mrf.mxu0
        %v956 = vadd.f32 0.0, %v955
        %v957 = vpop.f32.mrf.mxu0
        %958 = vmatprep.mubr.f32.mxu0 0.0
        %v959 = vand.u32 %v820, 4294901760
        %v960 = vsub.f32 %v820, %v959
        %v961 = vand.u32 %v960, 4294901760
        %v962 = vsub.f32 %v960, %v961
        %v963 = vand.u32 %v962, 4294901760
        %964 = vmatmul.mubr.f32.gmra.mxu0 %v963
        %v965 = vpop.f32.mrf.mxu0
        %v966 = vadd.f32 0.0, %v965
        %v967 = vpop.f32.mrf.mxu0
        %968 = vdwg.mxu0
        %969 = vmatprep.subr.mxu0 0.0
        %970 = vmatpush1.msra.mxu0 0.0
        %971 = vmatprep.subr.mxu0 0.0
        %972 = vmatpush1.msra.mxu0 0.0
        %973 = vmatprep.subr.mxu0 0.0
        %974 = vmatpush1.msra.mxu0 0.0
        %975 = vmatprep.subr.mxu0 0.0
        %976 = vmatpush1.msra.mxu0 0.0
        %977 = vmatprep.subr.mxu0 0.0
        %978 = vmatpush1.msra.mxu0 0.0
        %979 = vmatprep.subr.mxu0 0.0
        %980 = vmatpush1.msra.mxu0 0.0
        %981 = vmatprep.subr.mxu0 0.0
        %982 = vmatpush1.msra.mxu0 0.0
        %983 = vmatprep.subr.mxu0 0.0
        %984 = vmatpush1.msra.mxu0 0.0
        %985 = vmatprep.subr.mxu0 0.0
        %986 = vmatpush1.msra.mxu0 0.0
        %987 = vmatprep.subr.mxu0 0.0
        %988 = vmatpush1.msra.mxu0 0.0
        %989 = vmatprep.subr.mxu0 0.0
        %990 = vmatpush1.msra.mxu0 0.0
        %991 = vmatprep.subr.mxu0 0.0
        %992 = vmatpush1.msra.mxu0 0.0
        %993 = vmatprep.subr.mxu0 0.0
        %994 = vmatpush1.msra.mxu0 0.0
        %995 = vmatprep.subr.mxu0 0.0
        %996 = vmatpush1.msra.mxu0 0.0
        %997 = vmatprep.subr.mxu0 0.0
        %v998 = vand.u32 %v286, 4294901760
        %v999 = vsub.f32 %v286, %v998
        %v1000 = vand.u32 %v999, 4294901760
        %v1001 = vsub.f32 %v999, %v1000
        %v1002 = vand.u32 %v1001, 4294901760
        %1003 = vmatpush1.msra.mxu0 %v1002
        %1004 = vmatprep.subr.mxu0 0.0
        %v1005 = vand.u32 %v285, 4294901760
        %v1006 = vsub.f32 %v285, %v1005
        %v1007 = vand.u32 %v1006, 4294901760
        %v1008 = vsub.f32 %v1006, %v1007
        %v1009 = vand.u32 %v1008, 4294901760
        %1010 = vmatpush1.msra.mxu0 %v1009
        %1011 = vmatprep.subr.mxu0 0.0
        %1012 = vmatpush2.msra.mxu0 0.0
        %1013 = vmatprep.subr.mxu0 0.0
        %1014 = vmatpush2.msra.mxu0 0.0
        %1015 = vmatprep.subr.mxu0 0.0
        %1016 = vmatpush2.msra.mxu0 0.0
        %1017 = vmatprep.subr.mxu0 0.0
        %1018 = vmatpush2.msra.mxu0 0.0
        %1019 = vmatprep.subr.mxu0 0.0
        %1020 = vmatpush2.msra.mxu0 0.0
        %1021 = vmatprep.subr.mxu0 0.0
        %1022 = vmatpush2.msra.mxu0 0.0
        %1023 = vmatprep.subr.mxu0 0.0
        %1024 = vmatpush2.msra.mxu0 0.0
        %1025 = vmatprep.subr.mxu0 0.0
        %1026 = vmatpush2.msra.mxu0 0.0
        %1027 = vmatprep.subr.mxu0 0.0
        %1028 = vmatpush2.msra.mxu0 0.0
        %1029 = vmatprep.subr.mxu0 0.0
        %1030 = vmatpush2.msra.mxu0 0.0
        %1031 = vmatprep.subr.mxu0 0.0
        %1032 = vmatpush2.msra.mxu0 0.0
        %1033 = vmatprep.subr.mxu0 0.0
        %1034 = vmatpush2.msra.mxu0 0.0
        %1035 = vmatprep.subr.mxu0 0.0
        %1036 = vmatpush2.msra.mxu0 0.0
        %1037 = vmatprep.subr.mxu0 0.0
        %1038 = vmatpush2.msra.mxu0 0.0
        %1039 = vmatprep.subr.mxu0 0.0
        %1040 = vmatpush2.msra.mxu0 0.0
        %1041 = vmatprep.subr.mxu0 0.0
        %1042 = vmatpush2.msra.mxu0 0.0
        %1043 = vmatprep.mubr.f32.mxu0 0.0
        %v1044 = vand.u32 %v799, 4294901760
        %1045 = vmatmul.mubr.f32.gmra.mxu0 %v1044
        %v1046 = vpop.f32.mrf.mxu0
        %v1047 = vadd.f32 %v896, %v1046
        %v1048 = vpop.f32.mrf.mxu0
        %1049 = vmatprep.mubr.f32.mxu0 0.0
        %v1050 = vand.u32 %v802, 4294901760
        %1051 = vmatmul.mubr.f32.gmra.mxu0 %v1050
        %v1052 = vpop.f32.mrf.mxu0
        %v1053 = vadd.f32 %v906, %v1052
        %v1054 = vpop.f32.mrf.mxu0
        %1055 = vmatprep.mubr.f32.mxu0 0.0
        %v1056 = vand.u32 %v805, 4294901760
        %1057 = vmatmul.mubr.f32.gmra.mxu0 %v1056
        %v1058 = vpop.f32.mrf.mxu0
        %v1059 = vadd.f32 %v916, %v1058
        %v1060 = vpop.f32.mrf.mxu0
        %1061 = vmatprep.mubr.f32.mxu0 0.0
        %v1062 = vand.u32 %v808, 4294901760
        %1063 = vmatmul.mubr.f32.gmra.mxu0 %v1062
        %v1064 = vpop.f32.mrf.mxu0
        %v1065 = vadd.f32 %v926, %v1064
        %v1066 = vpop.f32.mrf.mxu0
        %1067 = vmatprep.mubr.f32.mxu0 0.0
        %v1068 = vand.u32 %v811, 4294901760
        %1069 = vmatmul.mubr.f32.gmra.mxu0 %v1068
        %v1070 = vpop.f32.mrf.mxu0
        %v1071 = vadd.f32 %v936, %v1070
        %v1072 = vpop.f32.mrf.mxu0
        %1073 = vmatprep.mubr.f32.mxu0 0.0
        %v1074 = vand.u32 %v814, 4294901760
        %1075 = vmatmul.mubr.f32.gmra.mxu0 %v1074
        %v1076 = vpop.f32.mrf.mxu0
        %v1077 = vadd.f32 %v946, %v1076
        %v1078 = vpop.f32.mrf.mxu0
        %1079 = vmatprep.mubr.f32.mxu0 0.0
        %v1080 = vand.u32 %v817, 4294901760
        %1081 = vmatmul.mubr.f32.gmra.mxu0 %v1080
        %v1082 = vpop.f32.mrf.mxu0
        %v1083 = vadd.f32 %v956, %v1082
        %v1084 = vpop.f32.mrf.mxu0
        %1085 = vmatprep.mubr.f32.mxu0 0.0
        %v1086 = vand.u32 %v820, 4294901760
        %1087 = vmatmul.mubr.f32.gmra.mxu0 %v1086
        %v1088 = vpop.f32.mrf.mxu0
        %v1089 = vadd.f32 %v966, %v1088
        %v1090 = vpop.f32.mrf.mxu0
        %1091 = vdwg.mxu0
        %1092 = vmatprep.subr.mxu0 0.0
        %1093 = vmatpush1.msra.mxu0 0.0
        %1094 = vmatprep.subr.mxu0 0.0
        %1095 = vmatpush1.msra.mxu0 0.0
        %1096 = vmatprep.subr.mxu0 0.0
        %1097 = vmatpush1.msra.mxu0 0.0
        %1098 = vmatprep.subr.mxu0 0.0
        %1099 = vmatpush1.msra.mxu0 0.0
        %1100 = vmatprep.subr.mxu0 0.0
        %1101 = vmatpush1.msra.mxu0 0.0
        %1102 = vmatprep.subr.mxu0 0.0
        %1103 = vmatpush1.msra.mxu0 0.0
        %1104 = vmatprep.subr.mxu0 0.0
        %1105 = vmatpush1.msra.mxu0 0.0
        %1106 = vmatprep.subr.mxu0 0.0
        %1107 = vmatpush1.msra.mxu0 0.0
        %1108 = vmatprep.subr.mxu0 0.0
        %1109 = vmatpush1.msra.mxu0 0.0
        %1110 = vmatprep.subr.mxu0 0.0
        %1111 = vmatpush1.msra.mxu0 0.0
        %1112 = vmatprep.subr.mxu0 0.0
        %1113 = vmatpush1.msra.mxu0 0.0
        %1114 = vmatprep.subr.mxu0 0.0
        %1115 = vmatpush1.msra.mxu0 0.0
        %1116 = vmatprep.subr.mxu0 0.0
        %1117 = vmatpush1.msra.mxu0 0.0
        %1118 = vmatprep.subr.mxu0 0.0
        %1119 = vmatpush1.msra.mxu0 0.0
        %1120 = vmatprep.subr.mxu0 0.0
        %v1121 = vand.u32 %v286, 4294901760
        %v1122 = vsub.f32 %v286, %v1121
        %1123 = vmatpush1.msra.mxu0 %v1122
        %1124 = vmatprep.subr.mxu0 0.0
        %v1125 = vand.u32 %v285, 4294901760
        %v1126 = vsub.f32 %v285, %v1125
        %1127 = vmatpush1.msra.mxu0 %v1126
        %1128 = vmatprep.subr.mxu0 0.0
        %1129 = vmatpush2.msra.mxu0 0.0
        %1130 = vmatprep.subr.mxu0 0.0
        %1131 = vmatpush2.msra.mxu0 0.0
        %1132 = vmatprep.subr.mxu0 0.0
        %1133 = vmatpush2.msra.mxu0 0.0
        %1134 = vmatprep.subr.mxu0 0.0
        %1135 = vmatpush2.msra.mxu0 0.0
        %1136 = vmatprep.subr.mxu0 0.0
        %1137 = vmatpush2.msra.mxu0 0.0
        %1138 = vmatprep.subr.mxu0 0.0
        %1139 = vmatpush2.msra.mxu0 0.0
        %1140 = vmatprep.subr.mxu0 0.0
        %1141 = vmatpush2.msra.mxu0 0.0
        %1142 = vmatprep.subr.mxu0 0.0
        %1143 = vmatpush2.msra.mxu0 0.0
        %1144 = vmatprep.subr.mxu0 0.0
        %1145 = vmatpush2.msra.mxu0 0.0
        %1146 = vmatprep.subr.mxu0 0.0
        %1147 = vmatpush2.msra.mxu0 0.0
        %1148 = vmatprep.subr.mxu0 0.0
        %1149 = vmatpush2.msra.mxu0 0.0
        %1150 = vmatprep.subr.mxu0 0.0
        %1151 = vmatpush2.msra.mxu0 0.0
        %1152 = vmatprep.subr.mxu0 0.0
        %1153 = vmatpush2.msra.mxu0 0.0
        %1154 = vmatprep.subr.mxu0 0.0
        %1155 = vmatpush2.msra.mxu0 0.0
        %1156 = vmatprep.subr.mxu0 0.0
        %1157 = vmatpush2.msra.mxu0 0.0
        %1158 = vmatprep.subr.mxu0 0.0
        %1159 = vmatpush2.msra.mxu0 0.0
        %1160 = vmatprep.mubr.f32.mxu0 0.0
        %v1161 = vand.u32 %v799, 4294901760
        %v1162 = vsub.f32 %v799, %v1161
        %1163 = vmatmul.mubr.f32.gmra.mxu0 %v1162
        %v1164 = vpop.f32.mrf.mxu0
        %v1165 = vadd.f32 %v1047, %v1164
        %v1166 = vpop.f32.mrf.mxu0
        %1167 = vmatprep.mubr.f32.mxu0 0.0
        %v1168 = vand.u32 %v802, 4294901760
        %v1169 = vsub.f32 %v802, %v1168
        %1170 = vmatmul.mubr.f32.gmra.mxu0 %v1169
        %v1171 = vpop.f32.mrf.mxu0
        %v1172 = vadd.f32 %v1053, %v1171
        %v1173 = vpop.f32.mrf.mxu0
        %1174 = vmatprep.mubr.f32.mxu0 0.0
        %v1175 = vand.u32 %v805, 4294901760
        %v1176 = vsub.f32 %v805, %v1175
        %1177 = vmatmul.mubr.f32.gmra.mxu0 %v1176
        %v1178 = vpop.f32.mrf.mxu0
        %v1179 = vadd.f32 %v1059, %v1178
        %v1180 = vpop.f32.mrf.mxu0
        %1181 = vmatprep.mubr.f32.mxu0 0.0
        %v1182 = vand.u32 %v808, 4294901760
        %v1183 = vsub.f32 %v808, %v1182
        %1184 = vmatmul.mubr.f32.gmra.mxu0 %v1183
        %v1185 = vpop.f32.mrf.mxu0
        %v1186 = vadd.f32 %v1065, %v1185
        %v1187 = vpop.f32.mrf.mxu0
        %1188 = vmatprep.mubr.f32.mxu0 0.0
        %v1189 = vand.u32 %v811, 4294901760
        %v1190 = vsub.f32 %v811, %v1189
        %1191 = vmatmul.mubr.f32.gmra.mxu0 %v1190
        %v1192 = vpop.f32.mrf.mxu0
        %v1193 = vadd.f32 %v1071, %v1192
        %v1194 = vpop.f32.mrf.mxu0
        %1195 = vmatprep.mubr.f32.mxu0 0.0
        %v1196 = vand.u32 %v814, 4294901760
        %v1197 = vsub.f32 %v814, %v1196
        %1198 = vmatmul.mubr.f32.gmra.mxu0 %v1197
        %v1199 = vpop.f32.mrf.mxu0
        %v1200 = vadd.f32 %v1077, %v1199
        %v1201 = vpop.f32.mrf.mxu0
        %1202 = vmatprep.mubr.f32.mxu0 0.0
        %v1203 = vand.u32 %v817, 4294901760
        %v1204 = vsub.f32 %v817, %v1203
        %1205 = vmatmul.mubr.f32.gmra.mxu0 %v1204
        %v1206 = vpop.f32.mrf.mxu0
        %v1207 = vadd.f32 %v1083, %v1206
        %v1208 = vpop.f32.mrf.mxu0
        %1209 = vmatprep.mubr.f32.mxu0 0.0
        %v1210 = vand.u32 %v820, 4294901760
        %v1211 = vsub.f32 %v820, %v1210
        %1212 = vmatmul.mubr.f32.gmra.mxu0 %v1211
        %v1213 = vpop.f32.mrf.mxu0
        %v1214 = vadd.f32 %v1089, %v1213
        %v1215 = vpop.f32.mrf.mxu0
        %1216 = vdwg.mxu0
        %1217 = vmatprep.subr.mxu0 0.0
        %1218 = vmatpush1.msra.mxu0 0.0
        %1219 = vmatprep.subr.mxu0 0.0
        %1220 = vmatpush1.msra.mxu0 0.0
        %1221 = vmatprep.subr.mxu0 0.0
        %1222 = vmatpush1.msra.mxu0 0.0
        %1223 = vmatprep.subr.mxu0 0.0
        %1224 = vmatpush1.msra.mxu0 0.0
        %1225 = vmatprep.subr.mxu0 0.0
        %1226 = vmatpush1.msra.mxu0 0.0
        %1227 = vmatprep.subr.mxu0 0.0
        %1228 = vmatpush1.msra.mxu0 0.0
        %1229 = vmatprep.subr.mxu0 0.0
        %1230 = vmatpush1.msra.mxu0 0.0
        %1231 = vmatprep.subr.mxu0 0.0
        %1232 = vmatpush1.msra.mxu0 0.0
        %1233 = vmatprep.subr.mxu0 0.0
        %1234 = vmatpush1.msra.mxu0 0.0
        %1235 = vmatprep.subr.mxu0 0.0
        %1236 = vmatpush1.msra.mxu0 0.0
        %1237 = vmatprep.subr.mxu0 0.0
        %1238 = vmatpush1.msra.mxu0 0.0
        %1239 = vmatprep.subr.mxu0 0.0
        %1240 = vmatpush1.msra.mxu0 0.0
        %1241 = vmatprep.subr.mxu0 0.0
        %1242 = vmatpush1.msra.mxu0 0.0
        %1243 = vmatprep.subr.mxu0 0.0
        %1244 = vmatpush1.msra.mxu0 0.0
        %1245 = vmatprep.subr.mxu0 0.0
        %v1246 = vand.u32 %v286, 4294901760
        %1247 = vmatpush1.msra.mxu0 %v1246
        %1248 = vmatprep.subr.mxu0 0.0
        %v1249 = vand.u32 %v285, 4294901760
        %1250 = vmatpush1.msra.mxu0 %v1249
        %1251 = vmatprep.subr.mxu0 0.0
        %1252 = vmatpush2.msra.mxu0 0.0
        %1253 = vmatprep.subr.mxu0 0.0
        %1254 = vmatpush2.msra.mxu0 0.0
        %1255 = vmatprep.subr.mxu0 0.0
        %1256 = vmatpush2.msra.mxu0 0.0
        %1257 = vmatprep.subr.mxu0 0.0
        %1258 = vmatpush2.msra.mxu0 0.0
        %1259 = vmatprep.subr.mxu0 0.0
        %1260 = vmatpush2.msra.mxu0 0.0
        %1261 = vmatprep.subr.mxu0 0.0
        %1262 = vmatpush2.msra.mxu0 0.0
        %1263 = vmatprep.subr.mxu0 0.0
        %1264 = vmatpush2.msra.mxu0 0.0
        %1265 = vmatprep.subr.mxu0 0.0
        %1266 = vmatpush2.msra.mxu0 0.0
        %1267 = vmatprep.subr.mxu0 0.0
        %1268 = vmatpush2.msra.mxu0 0.0
        %1269 = vmatprep.subr.mxu0 0.0
        %1270 = vmatpush2.msra.mxu0 0.0
        %1271 = vmatprep.subr.mxu0 0.0
        %1272 = vmatpush2.msra.mxu0 0.0
        %1273 = vmatprep.subr.mxu0 0.0
        %1274 = vmatpush2.msra.mxu0 0.0
        %1275 = vmatprep.subr.mxu0 0.0
        %1276 = vmatpush2.msra.mxu0 0.0
        %1277 = vmatprep.subr.mxu0 0.0
        %1278 = vmatpush2.msra.mxu0 0.0
        %1279 = vmatprep.subr.mxu0 0.0
        %1280 = vmatpush2.msra.mxu0 0.0
        %1281 = vmatprep.subr.mxu0 0.0
        %1282 = vmatpush2.msra.mxu0 0.0
        %1283 = vmatprep.mubr.f32.mxu0 0.0
        %v1284 = vand.u32 %v799, 4294901760
        %v1285 = vsub.f32 %v799, %v1284
        %v1286 = vand.u32 %v1285, 4294901760
        %1287 = vmatmul.mubr.f32.gmra.mxu0 %v1286
        %v1288 = vpop.f32.mrf.mxu0
        %v1289 = vadd.f32 %v1165, %v1288
        %v1290 = vpop.f32.mrf.mxu0
        %1291 = vmatprep.mubr.f32.mxu0 0.0
        %v1292 = vand.u32 %v802, 4294901760
        %v1293 = vsub.f32 %v802, %v1292
        %v1294 = vand.u32 %v1293, 4294901760
        %1295 = vmatmul.mubr.f32.gmra.mxu0 %v1294
        %v1296 = vpop.f32.mrf.mxu0
        %v1297 = vadd.f32 %v1172, %v1296
        %v1298 = vpop.f32.mrf.mxu0
        %1299 = vmatprep.mubr.f32.mxu0 0.0
        %v1300 = vand.u32 %v805, 4294901760
        %v1301 = vsub.f32 %v805, %v1300
        %v1302 = vand.u32 %v1301, 4294901760
        %1303 = vmatmul.mubr.f32.gmra.mxu0 %v1302
        %v1304 = vpop.f32.mrf.mxu0
        %v1305 = vadd.f32 %v1179, %v1304
        %v1306 = vpop.f32.mrf.mxu0
        %1307 = vmatprep.mubr.f32.mxu0 0.0
        %v1308 = vand.u32 %v808, 4294901760
        %v1309 = vsub.f32 %v808, %v1308
        %v1310 = vand.u32 %v1309, 4294901760
        %1311 = vmatmul.mubr.f32.gmra.mxu0 %v1310
        %v1312 = vpop.f32.mrf.mxu0
        %v1313 = vadd.f32 %v1186, %v1312
        %v1314 = vpop.f32.mrf.mxu0
        %1315 = vmatprep.mubr.f32.mxu0 0.0
        %v1316 = vand.u32 %v811, 4294901760
        %v1317 = vsub.f32 %v811, %v1316
        %v1318 = vand.u32 %v1317, 4294901760
        %1319 = vmatmul.mubr.f32.gmra.mxu0 %v1318
        %v1320 = vpop.f32.mrf.mxu0
        %v1321 = vadd.f32 %v1193, %v1320
        %v1322 = vpop.f32.mrf.mxu0
        %1323 = vmatprep.mubr.f32.mxu0 0.0
        %v1324 = vand.u32 %v814, 4294901760
        %v1325 = vsub.f32 %v814, %v1324
        %v1326 = vand.u32 %v1325, 4294901760
        %1327 = vmatmul.mubr.f32.gmra.mxu0 %v1326
        %v1328 = vpop.f32.mrf.mxu0
        %v1329 = vadd.f32 %v1200, %v1328
        %v1330 = vpop.f32.mrf.mxu0
        %1331 = vmatprep.mubr.f32.mxu0 0.0
        %v1332 = vand.u32 %v817, 4294901760
        %v1333 = vsub.f32 %v817, %v1332
        %v1334 = vand.u32 %v1333, 4294901760
        %1335 = vmatmul.mubr.f32.gmra.mxu0 %v1334
        %v1336 = vpop.f32.mrf.mxu0
        %v1337 = vadd.f32 %v1207, %v1336
        %v1338 = vpop.f32.mrf.mxu0
        %1339 = vmatprep.mubr.f32.mxu0 0.0
        %v1340 = vand.u32 %v820, 4294901760
        %v1341 = vsub.f32 %v820, %v1340
        %v1342 = vand.u32 %v1341, 4294901760
        %1343 = vmatmul.mubr.f32.gmra.mxu0 %v1342
        %v1344 = vpop.f32.mrf.mxu0
        %v1345 = vadd.f32 %v1214, %v1344
        %v1346 = vpop.f32.mrf.mxu0
        %1347 = vdwg.mxu0
        %1348 = vmatprep.subr.mxu0 0.0
        %1349 = vmatpush1.msra.mxu0 0.0
        %1350 = vmatprep.subr.mxu0 0.0
        %1351 = vmatpush1.msra.mxu0 0.0
        %1352 = vmatprep.subr.mxu0 0.0
        %1353 = vmatpush1.msra.mxu0 0.0
        %1354 = vmatprep.subr.mxu0 0.0
        %1355 = vmatpush1.msra.mxu0 0.0
        %1356 = vmatprep.subr.mxu0 0.0
        %1357 = vmatpush1.msra.mxu0 0.0
        %1358 = vmatprep.subr.mxu0 0.0
        %1359 = vmatpush1.msra.mxu0 0.0
        %1360 = vmatprep.subr.mxu0 0.0
        %1361 = vmatpush1.msra.mxu0 0.0
        %1362 = vmatprep.subr.mxu0 0.0
        %1363 = vmatpush1.msra.mxu0 0.0
        %1364 = vmatprep.subr.mxu0 0.0
        %1365 = vmatpush1.msra.mxu0 0.0
        %1366 = vmatprep.subr.mxu0 0.0
        %1367 = vmatpush1.msra.mxu0 0.0
        %1368 = vmatprep.subr.mxu0 0.0
        %1369 = vmatpush1.msra.mxu0 0.0
        %1370 = vmatprep.subr.mxu0 0.0
        %1371 = vmatpush1.msra.mxu0 0.0
        %1372 = vmatprep.subr.mxu0 0.0
        %1373 = vmatpush1.msra.mxu0 0.0
        %1374 = vmatprep.subr.mxu0 0.0
        %1375 = vmatpush1.msra.mxu0 0.0
        %1376 = vmatprep.subr.mxu0 0.0
        %v1377 = vand.u32 %v286, 4294901760
        %v1378 = vsub.f32 %v286, %v1377
        %v1379 = vand.u32 %v1378, 4294901760
        %1380 = vmatpush1.msra.mxu0 %v1379
        %1381 = vmatprep.subr.mxu0 0.0
        %v1382 = vand.u32 %v285, 4294901760
        %v1383 = vsub.f32 %v285, %v1382
        %v1384 = vand.u32 %v1383, 4294901760
        %1385 = vmatpush1.msra.mxu0 %v1384
        %1386 = vmatprep.subr.mxu0 0.0
        %1387 = vmatpush2.msra.mxu0 0.0
        %1388 = vmatprep.subr.mxu0 0.0
        %1389 = vmatpush2.msra.mxu0 0.0
        %1390 = vmatprep.subr.mxu0 0.0
        %1391 = vmatpush2.msra.mxu0 0.0
        %1392 = vmatprep.subr.mxu0 0.0
        %1393 = vmatpush2.msra.mxu0 0.0
        %1394 = vmatprep.subr.mxu0 0.0
        %1395 = vmatpush2.msra.mxu0 0.0
        %1396 = vmatprep.subr.mxu0 0.0
        %1397 = vmatpush2.msra.mxu0 0.0
        %1398 = vmatprep.subr.mxu0 0.0
        %1399 = vmatpush2.msra.mxu0 0.0
        %1400 = vmatprep.subr.mxu0 0.0
        %1401 = vmatpush2.msra.mxu0 0.0
        %1402 = vmatprep.subr.mxu0 0.0
        %1403 = vmatpush2.msra.mxu0 0.0
        %1404 = vmatprep.subr.mxu0 0.0
        %1405 = vmatpush2.msra.mxu0 0.0
        %1406 = vmatprep.subr.mxu0 0.0
        %1407 = vmatpush2.msra.mxu0 0.0
        %1408 = vmatprep.subr.mxu0 0.0
        %1409 = vmatpush2.msra.mxu0 0.0
        %1410 = vmatprep.subr.mxu0 0.0
        %1411 = vmatpush2.msra.mxu0 0.0
        %1412 = vmatprep.subr.mxu0 0.0
        %1413 = vmatpush2.msra.mxu0 0.0
        %1414 = vmatprep.subr.mxu0 0.0
        %1415 = vmatpush2.msra.mxu0 0.0
        %1416 = vmatprep.subr.mxu0 0.0
        %1417 = vmatpush2.msra.mxu0 0.0
        %1418 = vmatprep.mubr.f32.mxu0 0.0
        %v1419 = vand.u32 %v799, 4294901760
        %1420 = vmatmul.mubr.f32.gmra.mxu0 %v1419
        %v1421 = vpop.f32.mrf.mxu0
        %v1422 = vadd.f32 %v1289, %v1421
        %v1423 = vpop.f32.mrf.mxu0
        %1424 = vmatprep.mubr.f32.mxu0 0.0
        %v1425 = vand.u32 %v802, 4294901760
        %1426 = vmatmul.mubr.f32.gmra.mxu0 %v1425
        %v1427 = vpop.f32.mrf.mxu0
        %v1428 = vadd.f32 %v1297, %v1427
        %v1429 = vpop.f32.mrf.mxu0
        %1430 = vmatprep.mubr.f32.mxu0 0.0
        %v1431 = vand.u32 %v805, 4294901760
        %1432 = vmatmul.mubr.f32.gmra.mxu0 %v1431
        %v1433 = vpop.f32.mrf.mxu0
        %v1434 = vadd.f32 %v1305, %v1433
        %v1435 = vpop.f32.mrf.mxu0
        %1436 = vmatprep.mubr.f32.mxu0 0.0
        %v1437 = vand.u32 %v808, 4294901760
        %1438 = vmatmul.mubr.f32.gmra.mxu0 %v1437
        %v1439 = vpop.f32.mrf.mxu0
        %v1440 = vadd.f32 %v1313, %v1439
        %v1441 = vpop.f32.mrf.mxu0
        %1442 = vmatprep.mubr.f32.mxu0 0.0
        %v1443 = vand.u32 %v811, 4294901760
        %1444 = vmatmul.mubr.f32.gmra.mxu0 %v1443
        %v1445 = vpop.f32.mrf.mxu0
        %v1446 = vadd.f32 %v1321, %v1445
        %v1447 = vpop.f32.mrf.mxu0
        %1448 = vmatprep.mubr.f32.mxu0 0.0
        %v1449 = vand.u32 %v814, 4294901760
        %1450 = vmatmul.mubr.f32.gmra.mxu0 %v1449
        %v1451 = vpop.f32.mrf.mxu0
        %v1452 = vadd.f32 %v1329, %v1451
        %v1453 = vpop.f32.mrf.mxu0
        %1454 = vmatprep.mubr.f32.mxu0 0.0
        %v1455 = vand.u32 %v817, 4294901760
        %1456 = vmatmul.mubr.f32.gmra.mxu0 %v1455
        %v1457 = vpop.f32.mrf.mxu0
        %v1458 = vadd.f32 %v1337, %v1457
        %v1459 = vpop.f32.mrf.mxu0
        %1460 = vmatprep.mubr.f32.mxu0 0.0
        %v1461 = vand.u32 %v820, 4294901760
        %1462 = vmatmul.mubr.f32.gmra.mxu0 %v1461
        %v1463 = vpop.f32.mrf.mxu0
        %v1464 = vadd.f32 %v1345, %v1463
        %v1465 = vpop.f32.mrf.mxu0
        %1466 = vdwg.mxu0
        %1467 = vmatprep.subr.mxu0 0.0
        %1468 = vmatpush1.msra.mxu0 0.0
        %1469 = vmatprep.subr.mxu0 0.0
        %1470 = vmatpush1.msra.mxu0 0.0
        %1471 = vmatprep.subr.mxu0 0.0
        %1472 = vmatpush1.msra.mxu0 0.0
        %1473 = vmatprep.subr.mxu0 0.0
        %1474 = vmatpush1.msra.mxu0 0.0
        %1475 = vmatprep.subr.mxu0 0.0
        %1476 = vmatpush1.msra.mxu0 0.0
        %1477 = vmatprep.subr.mxu0 0.0
        %1478 = vmatpush1.msra.mxu0 0.0
        %1479 = vmatprep.subr.mxu0 0.0
        %1480 = vmatpush1.msra.mxu0 0.0
        %1481 = vmatprep.subr.mxu0 0.0
        %1482 = vmatpush1.msra.mxu0 0.0
        %1483 = vmatprep.subr.mxu0 0.0
        %1484 = vmatpush1.msra.mxu0 0.0
        %1485 = vmatprep.subr.mxu0 0.0
        %1486 = vmatpush1.msra.mxu0 0.0
        %1487 = vmatprep.subr.mxu0 0.0
        %1488 = vmatpush1.msra.mxu0 0.0
        %1489 = vmatprep.subr.mxu0 0.0
        %1490 = vmatpush1.msra.mxu0 0.0
        %1491 = vmatprep.subr.mxu0 0.0
        %1492 = vmatpush1.msra.mxu0 0.0
        %1493 = vmatprep.subr.mxu0 0.0
        %1494 = vmatpush1.msra.mxu0 0.0
        %1495 = vmatprep.subr.mxu0 0.0
        %v1496 = vand.u32 %v286, 4294901760
        %1497 = vmatpush1.msra.mxu0 %v1496
        %1498 = vmatprep.subr.mxu0 0.0
        %v1499 = vand.u32 %v285, 4294901760
        %1500 = vmatpush1.msra.mxu0 %v1499
        %1501 = vmatprep.subr.mxu0 0.0
        %1502 = vmatpush2.msra.mxu0 0.0
        %1503 = vmatprep.subr.mxu0 0.0
        %1504 = vmatpush2.msra.mxu0 0.0
        %1505 = vmatprep.subr.mxu0 0.0
        %1506 = vmatpush2.msra.mxu0 0.0
        %1507 = vmatprep.subr.mxu0 0.0
        %1508 = vmatpush2.msra.mxu0 0.0
        %1509 = vmatprep.subr.mxu0 0.0
        %1510 = vmatpush2.msra.mxu0 0.0
        %1511 = vmatprep.subr.mxu0 0.0
        %1512 = vmatpush2.msra.mxu0 0.0
        %1513 = vmatprep.subr.mxu0 0.0
        %1514 = vmatpush2.msra.mxu0 0.0
        %1515 = vmatprep.subr.mxu0 0.0
        %1516 = vmatpush2.msra.mxu0 0.0
        %1517 = vmatprep.subr.mxu0 0.0
        %1518 = vmatpush2.msra.mxu0 0.0
        %1519 = vmatprep.subr.mxu0 0.0
        %1520 = vmatpush2.msra.mxu0 0.0
        %1521 = vmatprep.subr.mxu0 0.0
        %1522 = vmatpush2.msra.mxu0 0.0
        %1523 = vmatprep.subr.mxu0 0.0
        %1524 = vmatpush2.msra.mxu0 0.0
        %1525 = vmatprep.subr.mxu0 0.0
        %1526 = vmatpush2.msra.mxu0 0.0
        %1527 = vmatprep.subr.mxu0 0.0
        %1528 = vmatpush2.msra.mxu0 0.0
        %1529 = vmatprep.subr.mxu0 0.0
        %1530 = vmatpush2.msra.mxu0 0.0
        %1531 = vmatprep.subr.mxu0 0.0
        %1532 = vmatpush2.msra.mxu0 0.0
        %1533 = vmatprep.mubr.f32.mxu0 0.0
        %v1534 = vand.u32 %v799, 4294901760
        %1535 = vmatmul.mubr.f32.gmra.mxu0 %v1534
        %v1536 = vpop.f32.mrf.mxu0
        %v1537 = vadd.f32 %v1422, %v1536
        %v1538 = vpop.f32.mrf.mxu0
        %1539 = vmatprep.mubr.f32.mxu0 0.0
        %v1540 = vand.u32 %v802, 4294901760
        %1541 = vmatmul.mubr.f32.gmra.mxu0 %v1540
        %v1542 = vpop.f32.mrf.mxu0
        %v1543 = vadd.f32 %v1428, %v1542
        %v1544 = vpop.f32.mrf.mxu0
        %1545 = vmatprep.mubr.f32.mxu0 0.0
        %v1546 = vand.u32 %v805, 4294901760
        %1547 = vmatmul.mubr.f32.gmra.mxu0 %v1546
        %v1548 = vpop.f32.mrf.mxu0
        %v1549 = vadd.f32 %v1434, %v1548
        %v1550 = vpop.f32.mrf.mxu0
        %1551 = vmatprep.mubr.f32.mxu0 0.0
        %v1552 = vand.u32 %v808, 4294901760
        %1553 = vmatmul.mubr.f32.gmra.mxu0 %v1552
        %v1554 = vpop.f32.mrf.mxu0
        %v1555 = vadd.f32 %v1440, %v1554
        %v1556 = vpop.f32.mrf.mxu0
        %1557 = vmatprep.mubr.f32.mxu0 0.0
        %v1558 = vand.u32 %v811, 4294901760
        %1559 = vmatmul.mubr.f32.gmra.mxu0 %v1558
        %v1560 = vpop.f32.mrf.mxu0
        %v1561 = vadd.f32 %v1446, %v1560
        %v1562 = vpop.f32.mrf.mxu0
        %1563 = vmatprep.mubr.f32.mxu0 0.0
        %v1564 = vand.u32 %v814, 4294901760
        %1565 = vmatmul.mubr.f32.gmra.mxu0 %v1564
        %v1566 = vpop.f32.mrf.mxu0
        %v1567 = vadd.f32 %v1452, %v1566
        %v1568 = vpop.f32.mrf.mxu0
        %1569 = vmatprep.mubr.f32.mxu0 0.0
        %v1570 = vand.u32 %v817, 4294901760
        %1571 = vmatmul.mubr.f32.gmra.mxu0 %v1570
        %v1572 = vpop.f32.mrf.mxu0
        %v1573 = vadd.f32 %v1458, %v1572
        %v1574 = vpop.f32.mrf.mxu0
        %1575 = vmatprep.mubr.f32.mxu0 0.0
        %v1576 = vand.u32 %v820, 4294901760
        %1577 = vmatmul.mubr.f32.gmra.mxu0 %v1576
        %v1578 = vpop.f32.mrf.mxu0
        %v1579 = vadd.f32 %v1464, %v1578
        %v1580 = vpop.f32.mrf.mxu0
        %1581 = vdwg.mxu0
        %1582 = vxpose.xlu0.b32.start [1/16] %v1537, 128
        %1583 = vxpose.xlu0.b32.cont [2/16] %v1543, 128
        %1584 = vxpose.xlu0.b32.cont [3/16] 0.0, 128
        %1585 = vxpose.xlu0.b32.cont [4/16] 0.0, 128
        %1586 = vxpose.xlu0.b32.cont [5/16] 0.0, 128
        %1587 = vxpose.xlu0.b32.cont [6/16] 0.0, 128
        %1588 = vxpose.xlu0.b32.cont [7/16] 0.0, 128
        %1589 = vxpose.xlu0.b32.cont [8/16] 0.0, 128
        %1590 = vxpose.xlu0.b32.cont [9/16] 0.0, 128
        %1591 = vxpose.xlu0.b32.cont [10/16] 0.0, 128
        %1592 = vxpose.xlu0.b32.cont [11/16] 0.0, 128
        %1593 = vxpose.xlu0.b32.cont [12/16] 0.0, 128
        %1594 = vxpose.xlu0.b32.cont [13/16] 0.0, 128
        %1595 = vxpose.xlu0.b32.cont [14/16] 0.0, 128
        %1596 = vxpose.xlu0.b32.cont [15/16] 0.0, 128
        %1597 = vxpose.xlu0.b32.end [16/16] 0.0, 128
        %v1598 = vpop.trf.xlu0
        %v1599 = vpop.trf.xlu0
        %v1600 = vpop.trf.xlu0
        %v1601 = vpop.trf.xlu0
        %v1602 = vpop.trf.xlu0
        %v1603 = vpop.trf.xlu0
        %v1604 = vpop.trf.xlu0
        %v1605 = vpop.trf.xlu0
        %v1606 = vpop.trf.xlu0
        %v1607 = vpop.trf.xlu0
        %v1608 = vpop.trf.xlu0
        %v1609 = vpop.trf.xlu0
        %v1610 = vpop.trf.xlu0
        %v1611 = vpop.trf.xlu0
        %v1612 = vpop.trf.xlu0
        %v1613 = vpop.trf.xlu0
        %1614 = vxpose.xlu0.b32.start [1/16] %v1549, 128
        %1615 = vxpose.xlu0.b32.cont [2/16] %v1555, 128
        %1616 = vxpose.xlu0.b32.cont [3/16] 0.0, 128
        %1617 = vxpose.xlu0.b32.cont [4/16] 0.0, 128
        %1618 = vxpose.xlu0.b32.cont [5/16] 0.0, 128
        %1619 = vxpose.xlu0.b32.cont [6/16] 0.0, 128
        %1620 = vxpose.xlu0.b32.cont [7/16] 0.0, 128
        %1621 = vxpose.xlu0.b32.cont [8/16] 0.0, 128
        %1622 = vxpose.xlu0.b32.cont [9/16] 0.0, 128
        %1623 = vxpose.xlu0.b32.cont [10/16] 0.0, 128
        %1624 = vxpose.xlu0.b32.cont [11/16] 0.0, 128
        %1625 = vxpose.xlu0.b32.cont [12/16] 0.0, 128
        %1626 = vxpose.xlu0.b32.cont [13/16] 0.0, 128
        %1627 = vxpose.xlu0.b32.cont [14/16] 0.0, 128
        %1628 = vxpose.xlu0.b32.cont [15/16] 0.0, 128
        %1629 = vxpose.xlu0.b32.end [16/16] 0.0, 128
        %v1630 = vpop.trf.xlu0
        %v1631 = vpop.trf.xlu0
        %v1632 = vpop.trf.xlu0
        %v1633 = vpop.trf.xlu0
        %v1634 = vpop.trf.xlu0
        %v1635 = vpop.trf.xlu0
        %v1636 = vpop.trf.xlu0
        %v1637 = vpop.trf.xlu0
        %v1638 = vpop.trf.xlu0
        %v1639 = vpop.trf.xlu0
        %v1640 = vpop.trf.xlu0
        %v1641 = vpop.trf.xlu0
        %v1642 = vpop.trf.xlu0
        %v1643 = vpop.trf.xlu0
        %v1644 = vpop.trf.xlu0
        %v1645 = vpop.trf.xlu0
        %1646 = vxpose.xlu0.b32.start [1/16] %v1561, 128
        %1647 = vxpose.xlu0.b32.cont [2/16] %v1567, 128
        %1648 = vxpose.xlu0.b32.cont [3/16] 0.0, 128
        %1649 = vxpose.xlu0.b32.cont [4/16] 0.0, 128
        %1650 = vxpose.xlu0.b32.cont [5/16] 0.0, 128
        %1651 = vxpose.xlu0.b32.cont [6/16] 0.0, 128
        %1652 = vxpose.xlu0.b32.cont [7/16] 0.0, 128
        %1653 = vxpose.xlu0.b32.cont [8/16] 0.0, 128
        %1654 = vxpose.xlu0.b32.cont [9/16] 0.0, 128
        %1655 = vxpose.xlu0.b32.cont [10/16] 0.0, 128
        %1656 = vxpose.xlu0.b32.cont [11/16] 0.0, 128
        %1657 = vxpose.xlu0.b32.cont [12/16] 0.0, 128
        %1658 = vxpose.xlu0.b32.cont [13/16] 0.0, 128
        %1659 = vxpose.xlu0.b32.cont [14/16] 0.0, 128
        %1660 = vxpose.xlu0.b32.cont [15/16] 0.0, 128
        %1661 = vxpose.xlu0.b32.end [16/16] 0.0, 128
        %v1662 = vpop.trf.xlu0
        %v1663 = vpop.trf.xlu0
        %v1664 = vpop.trf.xlu0
        %v1665 = vpop.trf.xlu0
        %v1666 = vpop.trf.xlu0
        %v1667 = vpop.trf.xlu0
        %v1668 = vpop.trf.xlu0
        %v1669 = vpop.trf.xlu0
        %v1670 = vpop.trf.xlu0
        %v1671 = vpop.trf.xlu0
        %v1672 = vpop.trf.xlu0
        %v1673 = vpop.trf.xlu0
        %v1674 = vpop.trf.xlu0
        %v1675 = vpop.trf.xlu0
        %v1676 = vpop.trf.xlu0
        %v1677 = vpop.trf.xlu0
        %1678 = vxpose.xlu0.b32.start [1/16] %v1573, 128
        %1679 = vxpose.xlu0.b32.cont [2/16] %v1579, 128
        %1680 = vxpose.xlu0.b32.cont [3/16] 0.0, 128
        %1681 = vxpose.xlu0.b32.cont [4/16] 0.0, 128
        %1682 = vxpose.xlu0.b32.cont [5/16] 0.0, 128
        %1683 = vxpose.xlu0.b32.cont [6/16] 0.0, 128
        %1684 = vxpose.xlu0.b32.cont [7/16] 0.0, 128
        %1685 = vxpose.xlu0.b32.cont [8/16] 0.0, 128
        %1686 = vxpose.xlu0.b32.cont [9/16] 0.0, 128
        %1687 = vxpose.xlu0.b32.cont [10/16] 0.0, 128
        %1688 = vxpose.xlu0.b32.cont [11/16] 0.0, 128
        %1689 = vxpose.xlu0.b32.cont [12/16] 0.0, 128
        %1690 = vxpose.xlu0.b32.cont [13/16] 0.0, 128
        %1691 = vxpose.xlu0.b32.cont [14/16] 0.0, 128
        %1692 = vxpose.xlu0.b32.cont [15/16] 0.0, 128
        %1693 = vxpose.xlu0.b32.end [16/16] 0.0, 128
        %v1694 = vpop.trf.xlu0
        %v1695 = vpop.trf.xlu0
        %v1696 = vpop.trf.xlu0
        %v1697 = vpop.trf.xlu0
        %v1698 = vpop.trf.xlu0
        %v1699 = vpop.trf.xlu0
        %v1700 = vpop.trf.xlu0
        %v1701 = vpop.trf.xlu0
        %v1702 = vpop.trf.xlu0
        %v1703 = vpop.trf.xlu0
        %v1704 = vpop.trf.xlu0
        %v1705 = vpop.trf.xlu0
        %v1706 = vpop.trf.xlu0
        %v1707 = vpop.trf.xlu0
        %v1708 = vpop.trf.xlu0
        %v1709 = vpop.trf.xlu0
        %v1711 = vsel %vm797, %v1598, 0
        %v1714 = vsel %vm797, %v1630, 0
        %v1717 = vsel %vm797, %v1662, 0
        %v1720 = vsel %vm797, %v1694, 0
        %1722 = vmatprep.subr.mxu0 0.0
        %1723 = vmatpush1.msra.mxu0 0.0
        %1724 = vmatprep.subr.mxu0 0.0
        %1725 = vmatpush1.msra.mxu0 0.0
        %1726 = vmatprep.subr.mxu0 0.0
        %1727 = vmatpush1.msra.mxu0 0.0
        %1728 = vmatprep.subr.mxu0 0.0
        %1729 = vmatpush1.msra.mxu0 0.0
        %1730 = vmatprep.subr.mxu0 0.0
        %1731 = vmatpush1.msra.mxu0 0.0
        %1732 = vmatprep.subr.mxu0 0.0
        %1733 = vmatpush1.msra.mxu0 0.0
        %1734 = vmatprep.subr.mxu0 0.0
        %1735 = vmatpush1.msra.mxu0 0.0
        %1736 = vmatprep.subr.mxu0 0.0
        %1737 = vmatpush1.msra.mxu0 0.0
        %1738 = vmatprep.subr.mxu0 0.0
        %1739 = vmatpush1.msra.mxu0 0.0
        %1740 = vmatprep.subr.mxu0 0.0
        %1741 = vmatpush1.msra.mxu0 0.0
        %1742 = vmatprep.subr.mxu0 0.0
        %1743 = vmatpush1.msra.mxu0 0.0
        %1744 = vmatprep.subr.mxu0 0.0
        %1745 = vmatpush1.msra.mxu0 0.0
        %1746 = vmatprep.subr.mxu0 0.0
        %1747 = vmatpush1.msra.mxu0 0.0
        %1748 = vmatprep.subr.mxu0 0.0
        %1749 = vmatpush1.msra.mxu0 0.0
        %1750 = vmatprep.subr.mxu0 0.0
        %v1751 = vand.u32 %v288, 4294901760
        %1752 = vmatpush1.msra.mxu0 %v1751
        %1753 = vmatprep.subr.mxu0 0.0
        %v1754 = vand.u32 %v287, 4294901760
        %1755 = vmatpush1.msra.mxu0 %v1754
        %1756 = vmatprep.subr.mxu0 0.0
        %1757 = vmatpush2.msra.mxu0 0.0
        %1758 = vmatprep.subr.mxu0 0.0
        %1759 = vmatpush2.msra.mxu0 0.0
        %1760 = vmatprep.subr.mxu0 0.0
        %1761 = vmatpush2.msra.mxu0 0.0
        %1762 = vmatprep.subr.mxu0 0.0
        %1763 = vmatpush2.msra.mxu0 0.0
        %1764 = vmatprep.subr.mxu0 0.0
        %1765 = vmatpush2.msra.mxu0 0.0
        %1766 = vmatprep.subr.mxu0 0.0
        %1767 = vmatpush2.msra.mxu0 0.0
        %1768 = vmatprep.subr.mxu0 0.0
        %1769 = vmatpush2.msra.mxu0 0.0
        %1770 = vmatprep.subr.mxu0 0.0
        %1771 = vmatpush2.msra.mxu0 0.0
        %1772 = vmatprep.subr.mxu0 0.0
        %1773 = vmatpush2.msra.mxu0 0.0
        %1774 = vmatprep.subr.mxu0 0.0
        %1775 = vmatpush2.msra.mxu0 0.0
        %1776 = vmatprep.subr.mxu0 0.0
        %1777 = vmatpush2.msra.mxu0 0.0
        %1778 = vmatprep.subr.mxu0 0.0
        %1779 = vmatpush2.msra.mxu0 0.0
        %1780 = vmatprep.subr.mxu0 0.0
        %1781 = vmatpush2.msra.mxu0 0.0
        %1782 = vmatprep.subr.mxu0 0.0
        %1783 = vmatpush2.msra.mxu0 0.0
        %1784 = vmatprep.subr.mxu0 0.0
        %1785 = vmatpush2.msra.mxu0 0.0
        %1786 = vmatprep.subr.mxu0 0.0
        %1787 = vmatpush2.msra.mxu0 0.0
        %1788 = vmatprep.mubr.f32.mxu0 0.0
        %v1789 = vand.u32 %v1711, 4294901760
        %v1790 = vsub.f32 %v1711, %v1789
        %v1791 = vand.u32 %v1790, 4294901760
        %v1792 = vsub.f32 %v1790, %v1791
        %v1793 = vand.u32 %v1792, 4294901760
        %1794 = vmatmul.mubr.f32.gmra.mxu0 %v1793
        %v1795 = vpop.f32.mrf.mxu0
        %v1796 = vadd.f32 0.0, %v1795
        %v1797 = vpop.f32.mrf.mxu0
        %1798 = vmatprep.mubr.f32.mxu0 0.0
        %v1799 = vand.u32 %v1714, 4294901760
        %v1800 = vsub.f32 %v1714, %v1799
        %v1801 = vand.u32 %v1800, 4294901760
        %v1802 = vsub.f32 %v1800, %v1801
        %v1803 = vand.u32 %v1802, 4294901760
        %1804 = vmatmul.mubr.f32.gmra.mxu0 %v1803
        %v1805 = vpop.f32.mrf.mxu0
        %v1806 = vadd.f32 0.0, %v1805
        %v1807 = vpop.f32.mrf.mxu0
        %1808 = vmatprep.mubr.f32.mxu0 0.0
        %v1809 = vand.u32 %v1717, 4294901760
        %v1810 = vsub.f32 %v1717, %v1809
        %v1811 = vand.u32 %v1810, 4294901760
        %v1812 = vsub.f32 %v1810, %v1811
        %v1813 = vand.u32 %v1812, 4294901760
        %1814 = vmatmul.mubr.f32.gmra.mxu0 %v1813
        %v1815 = vpop.f32.mrf.mxu0
        %v1816 = vadd.f32 0.0, %v1815
        %v1817 = vpop.f32.mrf.mxu0
        %1818 = vmatprep.mubr.f32.mxu0 0.0
        %v1819 = vand.u32 %v1720, 4294901760
        %v1820 = vsub.f32 %v1720, %v1819
        %v1821 = vand.u32 %v1820, 4294901760
        %v1822 = vsub.f32 %v1820, %v1821
        %v1823 = vand.u32 %v1822, 4294901760
        %1824 = vmatmul.mubr.f32.gmra.mxu0 %v1823
        %v1825 = vpop.f32.mrf.mxu0
        %v1826 = vadd.f32 0.0, %v1825
        %v1827 = vpop.f32.mrf.mxu0
        %1828 = vdwg.mxu0
        %1829 = vmatprep.subr.mxu0 0.0
        %1830 = vmatpush1.msra.mxu0 0.0
        %1831 = vmatprep.subr.mxu0 0.0
        %1832 = vmatpush1.msra.mxu0 0.0
        %1833 = vmatprep.subr.mxu0 0.0
        %1834 = vmatpush1.msra.mxu0 0.0
        %1835 = vmatprep.subr.mxu0 0.0
        %1836 = vmatpush1.msra.mxu0 0.0
        %1837 = vmatprep.subr.mxu0 0.0
        %1838 = vmatpush1.msra.mxu0 0.0
        %1839 = vmatprep.subr.mxu0 0.0
        %1840 = vmatpush1.msra.mxu0 0.0
        %1841 = vmatprep.subr.mxu0 0.0
        %1842 = vmatpush1.msra.mxu0 0.0
        %1843 = vmatprep.subr.mxu0 0.0
        %1844 = vmatpush1.msra.mxu0 0.0
        %1845 = vmatprep.subr.mxu0 0.0
        %1846 = vmatpush1.msra.mxu0 0.0
        %1847 = vmatprep.subr.mxu0 0.0
        %1848 = vmatpush1.msra.mxu0 0.0
        %1849 = vmatprep.subr.mxu0 0.0
        %1850 = vmatpush1.msra.mxu0 0.0
        %1851 = vmatprep.subr.mxu0 0.0
        %1852 = vmatpush1.msra.mxu0 0.0
        %1853 = vmatprep.subr.mxu0 0.0
        %1854 = vmatpush1.msra.mxu0 0.0
        %1855 = vmatprep.subr.mxu0 0.0
        %1856 = vmatpush1.msra.mxu0 0.0
        %1857 = vmatprep.subr.mxu0 0.0
        %v1858 = vand.u32 %v288, 4294901760
        %v1859 = vsub.f32 %v288, %v1858
        %v1860 = vand.u32 %v1859, 4294901760
        %v1861 = vsub.f32 %v1859, %v1860
        %v1862 = vand.u32 %v1861, 4294901760
        %1863 = vmatpush1.msra.mxu0 %v1862
        %1864 = vmatprep.subr.mxu0 0.0
        %v1865 = vand.u32 %v287, 4294901760
        %v1866 = vsub.f32 %v287, %v1865
        %v1867 = vand.u32 %v1866, 4294901760
        %v1868 = vsub.f32 %v1866, %v1867
        %v1869 = vand.u32 %v1868, 4294901760
        %1870 = vmatpush1.msra.mxu0 %v1869
        %1871 = vmatprep.subr.mxu0 0.0
        %1872 = vmatpush2.msra.mxu0 0.0
        %1873 = vmatprep.subr.mxu0 0.0
        %1874 = vmatpush2.msra.mxu0 0.0
        %1875 = vmatprep.subr.mxu0 0.0
        %1876 = vmatpush2.msra.mxu0 0.0
        %1877 = vmatprep.subr.mxu0 0.0
        %1878 = vmatpush2.msra.mxu0 0.0
        %1879 = vmatprep.subr.mxu0 0.0
        %1880 = vmatpush2.msra.mxu0 0.0
        %1881 = vmatprep.subr.mxu0 0.0
        %1882 = vmatpush2.msra.mxu0 0.0
        %1883 = vmatprep.subr.mxu0 0.0
        %1884 = vmatpush2.msra.mxu0 0.0
        %1885 = vmatprep.subr.mxu0 0.0
        %1886 = vmatpush2.msra.mxu0 0.0
        %1887 = vmatprep.subr.mxu0 0.0
        %1888 = vmatpush2.msra.mxu0 0.0
        %1889 = vmatprep.subr.mxu0 0.0
        %1890 = vmatpush2.msra.mxu0 0.0
        %1891 = vmatprep.subr.mxu0 0.0
        %1892 = vmatpush2.msra.mxu0 0.0
        %1893 = vmatprep.subr.mxu0 0.0
        %1894 = vmatpush2.msra.mxu0 0.0
        %1895 = vmatprep.subr.mxu0 0.0
        %1896 = vmatpush2.msra.mxu0 0.0
        %1897 = vmatprep.subr.mxu0 0.0
        %1898 = vmatpush2.msra.mxu0 0.0
        %1899 = vmatprep.subr.mxu0 0.0
        %1900 = vmatpush2.msra.mxu0 0.0
        %1901 = vmatprep.subr.mxu0 0.0
        %1902 = vmatpush2.msra.mxu0 0.0
        %1903 = vmatprep.mubr.f32.mxu0 0.0
        %v1904 = vand.u32 %v1711, 4294901760
        %1905 = vmatmul.mubr.f32.gmra.mxu0 %v1904
        %v1906 = vpop.f32.mrf.mxu0
        %v1907 = vadd.f32 %v1796, %v1906
        %v1908 = vpop.f32.mrf.mxu0
        %1909 = vmatprep.mubr.f32.mxu0 0.0
        %v1910 = vand.u32 %v1714, 4294901760
        %1911 = vmatmul.mubr.f32.gmra.mxu0 %v1910
        %v1912 = vpop.f32.mrf.mxu0
        %v1913 = vadd.f32 %v1806, %v1912
        %v1914 = vpop.f32.mrf.mxu0
        %1915 = vmatprep.mubr.f32.mxu0 0.0
        %v1916 = vand.u32 %v1717, 4294901760
        %1917 = vmatmul.mubr.f32.gmra.mxu0 %v1916
        %v1918 = vpop.f32.mrf.mxu0
        %v1919 = vadd.f32 %v1816, %v1918
        %v1920 = vpop.f32.mrf.mxu0
        %1921 = vmatprep.mubr.f32.mxu0 0.0
        %v1922 = vand.u32 %v1720, 4294901760
        %1923 = vmatmul.mubr.f32.gmra.mxu0 %v1922
        %v1924 = vpop.f32.mrf.mxu0
        %v1925 = vadd.f32 %v1826, %v1924
        %v1926 = vpop.f32.mrf.mxu0
        %1927 = vdwg.mxu0
        %1928 = vmatprep.subr.mxu0 0.0
        %1929 = vmatpush1.msra.mxu0 0.0
        %1930 = vmatprep.subr.mxu0 0.0
        %1931 = vmatpush1.msra.mxu0 0.0
        %1932 = vmatprep.subr.mxu0 0.0
        %1933 = vmatpush1.msra.mxu0 0.0
        %1934 = vmatprep.subr.mxu0 0.0
        %1935 = vmatpush1.msra.mxu0 0.0
        %1936 = vmatprep.subr.mxu0 0.0
        %1937 = vmatpush1.msra.mxu0 0.0
        %1938 = vmatprep.subr.mxu0 0.0
        %1939 = vmatpush1.msra.mxu0 0.0
        %1940 = vmatprep.subr.mxu0 0.0
        %1941 = vmatpush1.msra.mxu0 0.0
        %1942 = vmatprep.subr.mxu0 0.0
        %1943 = vmatpush1.msra.mxu0 0.0
        %1944 = vmatprep.subr.mxu0 0.0
        %1945 = vmatpush1.msra.mxu0 0.0
        %1946 = vmatprep.subr.mxu0 0.0
        %1947 = vmatpush1.msra.mxu0 0.0
        %1948 = vmatprep.subr.mxu0 0.0
        %1949 = vmatpush1.msra.mxu0 0.0
        %1950 = vmatprep.subr.mxu0 0.0
        %1951 = vmatpush1.msra.mxu0 0.0
        %1952 = vmatprep.subr.mxu0 0.0
        %1953 = vmatpush1.msra.mxu0 0.0
        %1954 = vmatprep.subr.mxu0 0.0
        %1955 = vmatpush1.msra.mxu0 0.0
        %1956 = vmatprep.subr.mxu0 0.0
        %v1957 = vand.u32 %v288, 4294901760
        %v1958 = vsub.f32 %v288, %v1957
        %1959 = vmatpush1.msra.mxu0 %v1958
        %1960 = vmatprep.subr.mxu0 0.0
        %v1961 = vand.u32 %v287, 4294901760
        %v1962 = vsub.f32 %v287, %v1961
        %1963 = vmatpush1.msra.mxu0 %v1962
        %1964 = vmatprep.subr.mxu0 0.0
        %1965 = vmatpush2.msra.mxu0 0.0
        %1966 = vmatprep.subr.mxu0 0.0
        %1967 = vmatpush2.msra.mxu0 0.0
        %1968 = vmatprep.subr.mxu0 0.0
        %1969 = vmatpush2.msra.mxu0 0.0
        %1970 = vmatprep.subr.mxu0 0.0
        %1971 = vmatpush2.msra.mxu0 0.0
        %1972 = vmatprep.subr.mxu0 0.0
        %1973 = vmatpush2.msra.mxu0 0.0
        %1974 = vmatprep.subr.mxu0 0.0
        %1975 = vmatpush2.msra.mxu0 0.0
        %1976 = vmatprep.subr.mxu0 0.0
        %1977 = vmatpush2.msra.mxu0 0.0
        %1978 = vmatprep.subr.mxu0 0.0
        %1979 = vmatpush2.msra.mxu0 0.0
        %1980 = vmatprep.subr.mxu0 0.0
        %1981 = vmatpush2.msra.mxu0 0.0
        %1982 = vmatprep.subr.mxu0 0.0
        %1983 = vmatpush2.msra.mxu0 0.0
        %1984 = vmatprep.subr.mxu0 0.0
        %1985 = vmatpush2.msra.mxu0 0.0
        %1986 = vmatprep.subr.mxu0 0.0
        %1987 = vmatpush2.msra.mxu0 0.0
        %1988 = vmatprep.subr.mxu0 0.0
        %1989 = vmatpush2.msra.mxu0 0.0
        %1990 = vmatprep.subr.mxu0 0.0
        %1991 = vmatpush2.msra.mxu0 0.0
        %1992 = vmatprep.subr.mxu0 0.0
        %1993 = vmatpush2.msra.mxu0 0.0
        %1994 = vmatprep.subr.mxu0 0.0
        %1995 = vmatpush2.msra.mxu0 0.0
        %1996 = vmatprep.mubr.f32.mxu0 0.0
        %v1997 = vand.u32 %v1711, 4294901760
        %v1998 = vsub.f32 %v1711, %v1997
        %1999 = vmatmul.mubr.f32.gmra.mxu0 %v1998
        %v2000 = vpop.f32.mrf.mxu0
        %v2001 = vadd.f32 %v1907, %v2000
        %v2002 = vpop.f32.mrf.mxu0
        %2003 = vmatprep.mubr.f32.mxu0 0.0
        %v2004 = vand.u32 %v1714, 4294901760
        %v2005 = vsub.f32 %v1714, %v2004
        %2006 = vmatmul.mubr.f32.gmra.mxu0 %v2005
        %v2007 = vpop.f32.mrf.mxu0
        %v2008 = vadd.f32 %v1913, %v2007
        %v2009 = vpop.f32.mrf.mxu0
        %2010 = vmatprep.mubr.f32.mxu0 0.0
        %v2011 = vand.u32 %v1717, 4294901760
        %v2012 = vsub.f32 %v1717, %v2011
        %2013 = vmatmul.mubr.f32.gmra.mxu0 %v2012
        %v2014 = vpop.f32.mrf.mxu0
        %v2015 = vadd.f32 %v1919, %v2014
        %v2016 = vpop.f32.mrf.mxu0
        %2017 = vmatprep.mubr.f32.mxu0 0.0
        %v2018 = vand.u32 %v1720, 4294901760
        %v2019 = vsub.f32 %v1720, %v2018
        %2020 = vmatmul.mubr.f32.gmra.mxu0 %v2019
        %v2021 = vpop.f32.mrf.mxu0
        %v2022 = vadd.f32 %v1925, %v2021
        %v2023 = vpop.f32.mrf.mxu0
        %2024 = vdwg.mxu0
        %2025 = vmatprep.subr.mxu0 0.0
        %2026 = vmatpush1.msra.mxu0 0.0
        %2027 = vmatprep.subr.mxu0 0.0
        %2028 = vmatpush1.msra.mxu0 0.0
        %2029 = vmatprep.subr.mxu0 0.0
        %2030 = vmatpush1.msra.mxu0 0.0
        %2031 = vmatprep.subr.mxu0 0.0
        %2032 = vmatpush1.msra.mxu0 0.0
        %2033 = vmatprep.subr.mxu0 0.0
        %2034 = vmatpush1.msra.mxu0 0.0
        %2035 = vmatprep.subr.mxu0 0.0
        %2036 = vmatpush1.msra.mxu0 0.0
        %2037 = vmatprep.subr.mxu0 0.0
        %2038 = vmatpush1.msra.mxu0 0.0
        %2039 = vmatprep.subr.mxu0 0.0
        %2040 = vmatpush1.msra.mxu0 0.0
        %2041 = vmatprep.subr.mxu0 0.0
        %2042 = vmatpush1.msra.mxu0 0.0
        %2043 = vmatprep.subr.mxu0 0.0
        %2044 = vmatpush1.msra.mxu0 0.0
        %2045 = vmatprep.subr.mxu0 0.0
        %2046 = vmatpush1.msra.mxu0 0.0
        %2047 = vmatprep.subr.mxu0 0.0
        %2048 = vmatpush1.msra.mxu0 0.0
        %2049 = vmatprep.subr.mxu0 0.0
        %2050 = vmatpush1.msra.mxu0 0.0
        %2051 = vmatprep.subr.mxu0 0.0
        %2052 = vmatpush1.msra.mxu0 0.0
        %2053 = vmatprep.subr.mxu0 0.0
        %v2054 = vand.u32 %v288, 4294901760
        %2055 = vmatpush1.msra.mxu0 %v2054
        %2056 = vmatprep.subr.mxu0 0.0
        %v2057 = vand.u32 %v287, 4294901760
        %2058 = vmatpush1.msra.mxu0 %v2057
        %2059 = vmatprep.subr.mxu0 0.0
        %2060 = vmatpush2.msra.mxu0 0.0
        %2061 = vmatprep.subr.mxu0 0.0
        %2062 = vmatpush2.msra.mxu0 0.0
        %2063 = vmatprep.subr.mxu0 0.0
        %2064 = vmatpush2.msra.mxu0 0.0
        %2065 = vmatprep.subr.mxu0 0.0
        %2066 = vmatpush2.msra.mxu0 0.0
        %2067 = vmatprep.subr.mxu0 0.0
        %2068 = vmatpush2.msra.mxu0 0.0
        %2069 = vmatprep.subr.mxu0 0.0
        %2070 = vmatpush2.msra.mxu0 0.0
        %2071 = vmatprep.subr.mxu0 0.0
        %2072 = vmatpush2.msra.mxu0 0.0
        %2073 = vmatprep.subr.mxu0 0.0
        %2074 = vmatpush2.msra.mxu0 0.0
        %2075 = vmatprep.subr.mxu0 0.0
        %2076 = vmatpush2.msra.mxu0 0.0
        %2077 = vmatprep.subr.mxu0 0.0
        %2078 = vmatpush2.msra.mxu0 0.0
        %2079 = vmatprep.subr.mxu0 0.0
        %2080 = vmatpush2.msra.mxu0 0.0
        %2081 = vmatprep.subr.mxu0 0.0
        %2082 = vmatpush2.msra.mxu0 0.0
        %2083 = vmatprep.subr.mxu0 0.0
        %2084 = vmatpush2.msra.mxu0 0.0
        %2085 = vmatprep.subr.mxu0 0.0
        %2086 = vmatpush2.msra.mxu0 0.0
        %2087 = vmatprep.subr.mxu0 0.0
        %2088 = vmatpush2.msra.mxu0 0.0
        %2089 = vmatprep.subr.mxu0 0.0
        %2090 = vmatpush2.msra.mxu0 0.0
        %2091 = vmatprep.mubr.f32.mxu0 0.0
        %v2092 = vand.u32 %v1711, 4294901760
        %v2093 = vsub.f32 %v1711, %v2092
        %v2094 = vand.u32 %v2093, 4294901760
        %2095 = vmatmul.mubr.f32.gmra.mxu0 %v2094
        %v2096 = vpop.f32.mrf.mxu0
        %v2097 = vadd.f32 %v2001, %v2096
        %v2098 = vpop.f32.mrf.mxu0
        %2099 = vmatprep.mubr.f32.mxu0 0.0
        %v2100 = vand.u32 %v1714, 4294901760
        %v2101 = vsub.f32 %v1714, %v2100
        %v2102 = vand.u32 %v2101, 4294901760
        %2103 = vmatmul.mubr.f32.gmra.mxu0 %v2102
        %v2104 = vpop.f32.mrf.mxu0
        %v2105 = vadd.f32 %v2008, %v2104
        %v2106 = vpop.f32.mrf.mxu0
        %2107 = vmatprep.mubr.f32.mxu0 0.0
        %v2108 = vand.u32 %v1717, 4294901760
        %v2109 = vsub.f32 %v1717, %v2108
        %v2110 = vand.u32 %v2109, 4294901760
        %2111 = vmatmul.mubr.f32.gmra.mxu0 %v2110
        %v2112 = vpop.f32.mrf.mxu0
        %v2113 = vadd.f32 %v2015, %v2112
        %v2114 = vpop.f32.mrf.mxu0
        %2115 = vmatprep.mubr.f32.mxu0 0.0
        %v2116 = vand.u32 %v1720, 4294901760
        %v2117 = vsub.f32 %v1720, %v2116
        %v2118 = vand.u32 %v2117, 4294901760
        %2119 = vmatmul.mubr.f32.gmra.mxu0 %v2118
        %v2120 = vpop.f32.mrf.mxu0
        %v2121 = vadd.f32 %v2022, %v2120
        %v2122 = vpop.f32.mrf.mxu0
        %2123 = vdwg.mxu0
        %2124 = vmatprep.subr.mxu0 0.0
        %2125 = vmatpush1.msra.mxu0 0.0
        %2126 = vmatprep.subr.mxu0 0.0
        %2127 = vmatpush1.msra.mxu0 0.0
        %2128 = vmatprep.subr.mxu0 0.0
        %2129 = vmatpush1.msra.mxu0 0.0
        %2130 = vmatprep.subr.mxu0 0.0
        %2131 = vmatpush1.msra.mxu0 0.0
        %2132 = vmatprep.subr.mxu0 0.0
        %2133 = vmatpush1.msra.mxu0 0.0
        %2134 = vmatprep.subr.mxu0 0.0
        %2135 = vmatpush1.msra.mxu0 0.0
        %2136 = vmatprep.subr.mxu0 0.0
        %2137 = vmatpush1.msra.mxu0 0.0
        %2138 = vmatprep.subr.mxu0 0.0
        %2139 = vmatpush1.msra.mxu0 0.0
        %2140 = vmatprep.subr.mxu0 0.0
        %2141 = vmatpush1.msra.mxu0 0.0
        %2142 = vmatprep.subr.mxu0 0.0
        %2143 = vmatpush1.msra.mxu0 0.0
        %2144 = vmatprep.subr.mxu0 0.0
        %2145 = vmatpush1.msra.mxu0 0.0
        %2146 = vmatprep.subr.mxu0 0.0
        %2147 = vmatpush1.msra.mxu0 0.0
        %2148 = vmatprep.subr.mxu0 0.0
        %2149 = vmatpush1.msra.mxu0 0.0
        %2150 = vmatprep.subr.mxu0 0.0
        %2151 = vmatpush1.msra.mxu0 0.0
        %2152 = vmatprep.subr.mxu0 0.0
        %v2153 = vand.u32 %v288, 4294901760
        %v2154 = vsub.f32 %v288, %v2153
        %v2155 = vand.u32 %v2154, 4294901760
        %2156 = vmatpush1.msra.mxu0 %v2155
        %2157 = vmatprep.subr.mxu0 0.0
        %v2158 = vand.u32 %v287, 4294901760
        %v2159 = vsub.f32 %v287, %v2158
        %v2160 = vand.u32 %v2159, 4294901760
        %2161 = vmatpush1.msra.mxu0 %v2160
        %2162 = vmatprep.subr.mxu0 0.0
        %2163 = vmatpush2.msra.mxu0 0.0
        %2164 = vmatprep.subr.mxu0 0.0
        %2165 = vmatpush2.msra.mxu0 0.0
        %2166 = vmatprep.subr.mxu0 0.0
        %2167 = vmatpush2.msra.mxu0 0.0
        %2168 = vmatprep.subr.mxu0 0.0
        %2169 = vmatpush2.msra.mxu0 0.0
        %2170 = vmatprep.subr.mxu0 0.0
        %2171 = vmatpush2.msra.mxu0 0.0
        %2172 = vmatprep.subr.mxu0 0.0
        %2173 = vmatpush2.msra.mxu0 0.0
        %2174 = vmatprep.subr.mxu0 0.0
        %2175 = vmatpush2.msra.mxu0 0.0
        %2176 = vmatprep.subr.mxu0 0.0
        %2177 = vmatpush2.msra.mxu0 0.0
        %2178 = vmatprep.subr.mxu0 0.0
        %2179 = vmatpush2.msra.mxu0 0.0
        %2180 = vmatprep.subr.mxu0 0.0
        %2181 = vmatpush2.msra.mxu0 0.0
        %2182 = vmatprep.subr.mxu0 0.0
        %2183 = vmatpush2.msra.mxu0 0.0
        %2184 = vmatprep.subr.mxu0 0.0
        %2185 = vmatpush2.msra.mxu0 0.0
        %2186 = vmatprep.subr.mxu0 0.0
        %2187 = vmatpush2.msra.mxu0 0.0
        %2188 = vmatprep.subr.mxu0 0.0
        %2189 = vmatpush2.msra.mxu0 0.0
        %2190 = vmatprep.subr.mxu0 0.0
        %2191 = vmatpush2.msra.mxu0 0.0
        %2192 = vmatprep.subr.mxu0 0.0
        %2193 = vmatpush2.msra.mxu0 0.0
        %2194 = vmatprep.mubr.f32.mxu0 0.0
        %v2195 = vand.u32 %v1711, 4294901760
        %2196 = vmatmul.mubr.f32.gmra.mxu0 %v2195
        %v2197 = vpop.f32.mrf.mxu0
        %v2198 = vadd.f32 %v2097, %v2197
        %v2199 = vpop.f32.mrf.mxu0
        %2200 = vmatprep.mubr.f32.mxu0 0.0
        %v2201 = vand.u32 %v1714, 4294901760
        %2202 = vmatmul.mubr.f32.gmra.mxu0 %v2201
        %v2203 = vpop.f32.mrf.mxu0
        %v2204 = vadd.f32 %v2105, %v2203
        %v2205 = vpop.f32.mrf.mxu0
        %2206 = vmatprep.mubr.f32.mxu0 0.0
        %v2207 = vand.u32 %v1717, 4294901760
        %2208 = vmatmul.mubr.f32.gmra.mxu0 %v2207
        %v2209 = vpop.f32.mrf.mxu0
        %v2210 = vadd.f32 %v2113, %v2209
        %v2211 = vpop.f32.mrf.mxu0
        %2212 = vmatprep.mubr.f32.mxu0 0.0
        %v2213 = vand.u32 %v1720, 4294901760
        %2214 = vmatmul.mubr.f32.gmra.mxu0 %v2213
        %v2215 = vpop.f32.mrf.mxu0
        %v2216 = vadd.f32 %v2121, %v2215
        %v2217 = vpop.f32.mrf.mxu0
        %2218 = vdwg.mxu0
        %2219 = vmatprep.subr.mxu0 0.0
        %2220 = vmatpush1.msra.mxu0 0.0
        %2221 = vmatprep.subr.mxu0 0.0
        %2222 = vmatpush1.msra.mxu0 0.0
        %2223 = vmatprep.subr.mxu0 0.0
        %2224 = vmatpush1.msra.mxu0 0.0
        %2225 = vmatprep.subr.mxu0 0.0
        %2226 = vmatpush1.msra.mxu0 0.0
        %2227 = vmatprep.subr.mxu0 0.0
        %2228 = vmatpush1.msra.mxu0 0.0
        %2229 = vmatprep.subr.mxu0 0.0
        %2230 = vmatpush1.msra.mxu0 0.0
        %2231 = vmatprep.subr.mxu0 0.0
        %2232 = vmatpush1.msra.mxu0 0.0
        %2233 = vmatprep.subr.mxu0 0.0
        %2234 = vmatpush1.msra.mxu0 0.0
        %2235 = vmatprep.subr.mxu0 0.0
        %2236 = vmatpush1.msra.mxu0 0.0
        %2237 = vmatprep.subr.mxu0 0.0
        %2238 = vmatpush1.msra.mxu0 0.0
        %2239 = vmatprep.subr.mxu0 0.0
        %2240 = vmatpush1.msra.mxu0 0.0
        %2241 = vmatprep.subr.mxu0 0.0
        %2242 = vmatpush1.msra.mxu0 0.0
        %2243 = vmatprep.subr.mxu0 0.0
        %2244 = vmatpush1.msra.mxu0 0.0
        %2245 = vmatprep.subr.mxu0 0.0
        %2246 = vmatpush1.msra.mxu0 0.0
        %2247 = vmatprep.subr.mxu0 0.0
        %v2248 = vand.u32 %v288, 4294901760
        %2249 = vmatpush1.msra.mxu0 %v2248
        %2250 = vmatprep.subr.mxu0 0.0
        %v2251 = vand.u32 %v287, 4294901760
        %2252 = vmatpush1.msra.mxu0 %v2251
        %2253 = vmatprep.subr.mxu0 0.0
        %2254 = vmatpush2.msra.mxu0 0.0
        %2255 = vmatprep.subr.mxu0 0.0
        %2256 = vmatpush2.msra.mxu0 0.0
        %2257 = vmatprep.subr.mxu0 0.0
        %2258 = vmatpush2.msra.mxu0 0.0
        %2259 = vmatprep.subr.mxu0 0.0
        %2260 = vmatpush2.msra.mxu0 0.0
        %2261 = vmatprep.subr.mxu0 0.0
        %2262 = vmatpush2.msra.mxu0 0.0
        %2263 = vmatprep.subr.mxu0 0.0
        %2264 = vmatpush2.msra.mxu0 0.0
        %2265 = vmatprep.subr.mxu0 0.0
        %2266 = vmatpush2.msra.mxu0 0.0
        %2267 = vmatprep.subr.mxu0 0.0
        %2268 = vmatpush2.msra.mxu0 0.0
        %2269 = vmatprep.subr.mxu0 0.0
        %2270 = vmatpush2.msra.mxu0 0.0
        %2271 = vmatprep.subr.mxu0 0.0
        %2272 = vmatpush2.msra.mxu0 0.0
        %2273 = vmatprep.subr.mxu0 0.0
        %2274 = vmatpush2.msra.mxu0 0.0
        %2275 = vmatprep.subr.mxu0 0.0
        %2276 = vmatpush2.msra.mxu0 0.0
        %2277 = vmatprep.subr.mxu0 0.0
        %2278 = vmatpush2.msra.mxu0 0.0
        %2279 = vmatprep.subr.mxu0 0.0
        %2280 = vmatpush2.msra.mxu0 0.0
        %2281 = vmatprep.subr.mxu0 0.0
        %2282 = vmatpush2.msra.mxu0 0.0
        %2283 = vmatprep.subr.mxu0 0.0
        %2284 = vmatpush2.msra.mxu0 0.0
        %2285 = vmatprep.mubr.f32.mxu0 0.0
        %v2286 = vand.u32 %v1711, 4294901760
        %2287 = vmatmul.mubr.f32.gmra.mxu0 %v2286
        %v2288 = vpop.f32.mrf.mxu0
        %v2289 = vadd.f32 %v2198, %v2288
        %v2290 = vpop.f32.mrf.mxu0
        %2291 = vmatprep.mubr.f32.mxu0 0.0
        %v2292 = vand.u32 %v1714, 4294901760
        %2293 = vmatmul.mubr.f32.gmra.mxu0 %v2292
        %v2294 = vpop.f32.mrf.mxu0
        %v2295 = vadd.f32 %v2204, %v2294
        %v2296 = vpop.f32.mrf.mxu0
        %2297 = vmatprep.mubr.f32.mxu0 0.0
        %v2298 = vand.u32 %v1717, 4294901760
        %2299 = vmatmul.mubr.f32.gmra.mxu0 %v2298
        %v2300 = vpop.f32.mrf.mxu0
        %v2301 = vadd.f32 %v2210, %v2300
        %v2302 = vpop.f32.mrf.mxu0
        %2303 = vmatprep.mubr.f32.mxu0 0.0
        %v2304 = vand.u32 %v1720, 4294901760
        %2305 = vmatmul.mubr.f32.gmra.mxu0 %v2304
        %v2306 = vpop.f32.mrf.mxu0
        %v2307 = vadd.f32 %v2216, %v2306
        %v2308 = vpop.f32.mrf.mxu0
        %2309 = vdwg.mxu0
        %2310 = vxpose.xlu0.b32.start [1/16] %v2289, 128
        %2311 = vxpose.xlu0.b32.cont [2/16] 0.0, 128
        %2312 = vxpose.xlu0.b32.cont [3/16] 0.0, 128
        %2313 = vxpose.xlu0.b32.cont [4/16] 0.0, 128
        %2314 = vxpose.xlu0.b32.cont [5/16] 0.0, 128
        %2315 = vxpose.xlu0.b32.cont [6/16] 0.0, 128
        %2316 = vxpose.xlu0.b32.cont [7/16] 0.0, 128
        %2317 = vxpose.xlu0.b32.cont [8/16] 0.0, 128
        %2318 = vxpose.xlu0.b32.cont [9/16] 0.0, 128
        %2319 = vxpose.xlu0.b32.cont [10/16] 0.0, 128
        %2320 = vxpose.xlu0.b32.cont [11/16] 0.0, 128
        %2321 = vxpose.xlu0.b32.cont [12/16] 0.0, 128
        %2322 = vxpose.xlu0.b32.cont [13/16] 0.0, 128
        %2323 = vxpose.xlu0.b32.cont [14/16] 0.0, 128
        %2324 = vxpose.xlu0.b32.cont [15/16] 0.0, 128
        %2325 = vxpose.xlu0.b32.end [16/16] 0.0, 128
        %v2326 = vpop.trf.xlu0
        %v2327 = vpop.trf.xlu0
        %v2328 = vpop.trf.xlu0
        %v2329 = vpop.trf.xlu0
        %v2330 = vpop.trf.xlu0
        %v2331 = vpop.trf.xlu0
        %v2332 = vpop.trf.xlu0
        %v2333 = vpop.trf.xlu0
        %v2334 = vpop.trf.xlu0
        %v2335 = vpop.trf.xlu0
        %v2336 = vpop.trf.xlu0
        %v2337 = vpop.trf.xlu0
        %v2338 = vpop.trf.xlu0
        %v2339 = vpop.trf.xlu0
        %v2340 = vpop.trf.xlu0
        %v2341 = vpop.trf.xlu0
        %2342 = vxpose.xlu0.b32.start [1/16] %v2295, 128
        %2343 = vxpose.xlu0.b32.cont [2/16] 0.0, 128
        %2344 = vxpose.xlu0.b32.cont [3/16] 0.0, 128
        %2345 = vxpose.xlu0.b32.cont [4/16] 0.0, 128
        %2346 = vxpose.xlu0.b32.cont [5/16] 0.0, 128
        %2347 = vxpose.xlu0.b32.cont [6/16] 0.0, 128
        %2348 = vxpose.xlu0.b32.cont [7/16] 0.0, 128
        %2349 = vxpose.xlu0.b32.cont [8/16] 0.0, 128
        %2350 = vxpose.xlu0.b32.cont [9/16] 0.0, 128
        %2351 = vxpose.xlu0.b32.cont [10/16] 0.0, 128
        %2352 = vxpose.xlu0.b32.cont [11/16] 0.0, 128
        %2353 = vxpose.xlu0.b32.cont [12/16] 0.0, 128
        %2354 = vxpose.xlu0.b32.cont [13/16] 0.0, 128
        %2355 = vxpose.xlu0.b32.cont [14/16] 0.0, 128
        %2356 = vxpose.xlu0.b32.cont [15/16] 0.0, 128
        %2357 = vxpose.xlu0.b32.end [16/16] 0.0, 128
        %v2358 = vpop.trf.xlu0
        %v2359 = vpop.trf.xlu0
        %v2360 = vpop.trf.xlu0
        %v2361 = vpop.trf.xlu0
        %v2362 = vpop.trf.xlu0
        %v2363 = vpop.trf.xlu0
        %v2364 = vpop.trf.xlu0
        %v2365 = vpop.trf.xlu0
        %v2366 = vpop.trf.xlu0
        %v2367 = vpop.trf.xlu0
        %v2368 = vpop.trf.xlu0
        %v2369 = vpop.trf.xlu0
        %v2370 = vpop.trf.xlu0
        %v2371 = vpop.trf.xlu0
        %v2372 = vpop.trf.xlu0
        %v2373 = vpop.trf.xlu0
        %2374 = vxpose.xlu0.b32.start [1/16] %v2301, 128
        %2375 = vxpose.xlu0.b32.cont [2/16] 0.0, 128
        %2376 = vxpose.xlu0.b32.cont [3/16] 0.0, 128
        %2377 = vxpose.xlu0.b32.cont [4/16] 0.0, 128
        %2378 = vxpose.xlu0.b32.cont [5/16] 0.0, 128
        %2379 = vxpose.xlu0.b32.cont [6/16] 0.0, 128
        %2380 = vxpose.xlu0.b32.cont [7/16] 0.0, 128
        %2381 = vxpose.xlu0.b32.cont [8/16] 0.0, 128
        %2382 = vxpose.xlu0.b32.cont [9/16] 0.0, 128
        %2383 = vxpose.xlu0.b32.cont [10/16] 0.0, 128
        %2384 = vxpose.xlu0.b32.cont [11/16] 0.0, 128
        %2385 = vxpose.xlu0.b32.cont [12/16] 0.0, 128
        %2386 = vxpose.xlu0.b32.cont [13/16] 0.0, 128
        %2387 = vxpose.xlu0.b32.cont [14/16] 0.0, 128
        %2388 = vxpose.xlu0.b32.cont [15/16] 0.0, 128
        %2389 = vxpose.xlu0.b32.end [16/16] 0.0, 128
        %v2390 = vpop.trf.xlu0
        %v2391 = vpop.trf.xlu0
        %v2392 = vpop.trf.xlu0
        %v2393 = vpop.trf.xlu0
        %v2394 = vpop.trf.xlu0
        %v2395 = vpop.trf.xlu0
        %v2396 = vpop.trf.xlu0
        %v2397 = vpop.trf.xlu0
        %v2398 = vpop.trf.xlu0
        %v2399 = vpop.trf.xlu0
        %v2400 = vpop.trf.xlu0
        %v2401 = vpop.trf.xlu0
        %v2402 = vpop.trf.xlu0
        %v2403 = vpop.trf.xlu0
        %v2404 = vpop.trf.xlu0
        %v2405 = vpop.trf.xlu0
        %2406 = vxpose.xlu0.b32.start [1/16] %v2307, 128
        %2407 = vxpose.xlu0.b32.cont [2/16] 0.0, 128
        %2408 = vxpose.xlu0.b32.cont [3/16] 0.0, 128
        %2409 = vxpose.xlu0.b32.cont [4/16] 0.0, 128
        %2410 = vxpose.xlu0.b32.cont [5/16] 0.0, 128
        %2411 = vxpose.xlu0.b32.cont [6/16] 0.0, 128
        %2412 = vxpose.xlu0.b32.cont [7/16] 0.0, 128
        %2413 = vxpose.xlu0.b32.cont [8/16] 0.0, 128
        %2414 = vxpose.xlu0.b32.cont [9/16] 0.0, 128
        %2415 = vxpose.xlu0.b32.cont [10/16] 0.0, 128
        %2416 = vxpose.xlu0.b32.cont [11/16] 0.0, 128
        %2417 = vxpose.xlu0.b32.cont [12/16] 0.0, 128
        %2418 = vxpose.xlu0.b32.cont [13/16] 0.0, 128
        %2419 = vxpose.xlu0.b32.cont [14/16] 0.0, 128
        %2420 = vxpose.xlu0.b32.cont [15/16] 0.0, 128
        %2421 = vxpose.xlu0.b32.end [16/16] 0.0, 128
        %v2422 = vpop.trf.xlu0
        %v2423 = vpop.trf.xlu0
        %v2424 = vpop.trf.xlu0
        %v2425 = vpop.trf.xlu0
        %v2426 = vpop.trf.xlu0
        %v2427 = vpop.trf.xlu0
        %v2428 = vpop.trf.xlu0
        %v2429 = vpop.trf.xlu0
        %v2430 = vpop.trf.xlu0
        %v2431 = vpop.trf.xlu0
        %v2432 = vpop.trf.xlu0
        %v2433 = vpop.trf.xlu0
        %v2434 = vpop.trf.xlu0
        %v2435 = vpop.trf.xlu0
        %v2436 = vpop.trf.xlu0
        %v2437 = vpop.trf.xlu0
        %vm2438 = vcmask 64512
        %2439 = vst.msk [vmem:[%s276] sm:$0xff] %vm2438, %v2326
        %2440 = vst.msk [vmem:[%s276 + $0x8] sm:$0xff] %vm2438, %v2358
        %2441 = vst.msk [vmem:[%s276 + $0x10] sm:$0xff] %vm2438, %v2390
        %2442 = vst.msk [vmem:[%s276 + $0x18] sm:$0xff] %vm2438, %v2422
        %v2443 = vsel %vm2438, %v2326, 0.0
        %2444 = vadd.xlane.f32.xlu0 %v2443
        %v2445 = vpop.xlane.xlu0 %2444
        %v2446 = vsel %vm2438, %v2358, 0.0
        %2447 = vadd.xlane.f32.xlu0 %v2446
        %v2448 = vpop.xlane.xlu0 %2447
        %v2449 = vsel %vm2438, %v2390, 0.0
        %2450 = vadd.xlane.f32.xlu0 %v2449
        %v2451 = vpop.xlane.xlu0 %2450
        %v2452 = vsel %vm2438, %v2422, 0.0
        %2453 = vadd.xlane.f32.xlu0 %v2452
        %v2454 = vpop.xlane.xlu0 %2453
        %v2459 = vlaneseq
        %v2460 = vand.u32 %v2459, 127
        %v2461 = vlaneseq
        %v2462 = vshrl.u32 %v2461, 7
        %v2463 = vsub.s32 %v2460, %v2462
        %v2464 = vrot.slane %v2445, %v2463
        %v2465 = vlaneseq
        %v2466 = vshrl.u32 %v2465, 7
        %v2467 = vsub.s32 %v2460, %v2466
        %v2468 = vrot.slane %v2448, %v2467
        %v2469 = vlaneseq
        %v2470 = vshrl.u32 %v2469, 7
        %v2471 = vsub.s32 %v2460, %v2470
        %v2472 = vrot.slane %v2451, %v2471
        %v2473 = vlaneseq
        %v2474 = vshrl.u32 %v2473, 7
        %v2475 = vsub.s32 %v2460, %v2474
        %v2476 = vrot.slane %v2454, %v2475
        %vm2477 = vcmask 1041409
        %v2478 = vsel %vm2477, %v2468, %v2464
        %vm2479 = vcmask 1042434
        %v2480 = vsel %vm2479, %v2472, %v2478
        %vm2481 = vcmask 1043459
        %v2482 = vsel %vm2481, %v2476, %v2480
        %vm2484 = vcmask 60416
        %v2485 = vsel %vm2484, %v2482, 0.0
        %2486 = vadd.xlane.f32.xlu0 %v2485
        %v2487 = vpop.xlane.xlu0 %2486
        %v2488 = vmul.f32 %v2326, %v2326
        %v2489 = vmul.f32 %v2358, %v2358
        %v2490 = vmul.f32 %v2390, %v2390
        %v2491 = vmul.f32 %v2422, %v2422
        %v2492 = vsel %vm2438, %v2488, 0.0
        %2493 = vadd.xlane.f32.xlu0 %v2492
        %v2494 = vpop.xlane.xlu0 %2493
        %v2495 = vsel %vm2438, %v2489, 0.0
        %2496 = vadd.xlane.f32.xlu0 %v2495
        %v2497 = vpop.xlane.xlu0 %2496
        %v2498 = vsel %vm2438, %v2490, 0.0
        %2499 = vadd.xlane.f32.xlu0 %v2498
        %v2500 = vpop.xlane.xlu0 %2499
        %v2501 = vsel %vm2438, %v2491, 0.0
        %2502 = vadd.xlane.f32.xlu0 %v2501
        %v2503 = vpop.xlane.xlu0 %2502
        %v2508 = vlaneseq
        %v2509 = vshrl.u32 %v2508, 7
        %v2510 = vsub.s32 %v2460, %v2509
        %v2511 = vrot.slane %v2494, %v2510
        %v2512 = vlaneseq
        %v2513 = vshrl.u32 %v2512, 7
        %v2514 = vsub.s32 %v2460, %v2513
        %v2515 = vrot.slane %v2497, %v2514
        %v2516 = vlaneseq
        %v2517 = vshrl.u32 %v2516, 7
        %v2518 = vsub.s32 %v2460, %v2517
        %v2519 = vrot.slane %v2500, %v2518
        %v2520 = vlaneseq
        %v2521 = vshrl.u32 %v2520, 7
        %v2522 = vsub.s32 %v2460, %v2521
        %v2523 = vrot.slane %v2503, %v2522
        %v2524 = vsel %vm2477, %v2515, %v2511
        %v2525 = vsel %vm2479, %v2519, %v2524
        %v2526 = vsel %vm2481, %v2523, %v2525
        %v2528 = vsel %vm2484, %v2526, 0.0
        %2529 = vadd.xlane.f32.xlu0 %v2528
        %v2530 = vpop.xlane.xlu0 %2529
        %v2531 = vld [vmem:[#allocation6] sm:$0x1]
        %v2533 = vlaneseq
        %v2534 = vshrl.u32 %v2533, 7
        %v2535 = vsub.s32 %v2460, %v2534
        %v2536 = vrot.slane %v2487, %v2535
        %v2538 = vadd.f32 %v2531, %v2536
        %vm2539 = vcmask 24576
        %2540 = vst.msk [vmem:[#allocation6] sm:$0x1] %vm2539, %v2538
        %v2541 = vld [vmem:[#allocation6 + $0x1] sm:$0x1]
        %v2543 = vlaneseq
        %v2544 = vshrl.u32 %v2543, 7
        %v2545 = vsub.s32 %v2460, %v2544
        %v2546 = vrot.slane %v2530, %v2545
        %v2548 = vadd.f32 %v2541, %v2546
        %2549 = vst.msk [vmem:[#allocation6 + $0x1] sm:$0x1] %vm2539, %v2548
        %s2550 = sand.u32 %s142, 1
        %s2551 = scalar_lea.sflag [#allocation4], %s2550
        %s2552 = sand.u32 %s142, 1
        %s2553 = smul.addr %s2552, 32
        %s2554 = scalar_lea.vmem [#allocation5], %s2553
        // Predicated region
        $region45: #{tpu_custom_call.1} parent=35 // pred_check
          %p2555 = pneg %p152
        $region46: #{tpu_custom_call.1} parent=35 // pred_check_branch
          %2557 = sbr.rel (%p2555) target = $region48
        $region47: #{tpu_custom_call.1} parent=35 // pred_region
          %s2558 = smul.u32 4, %s28
          %s2560 = ssub.s32 512, 512
          %2561 = vsyncadd %s2551, %s2560
          %s2562 = smul.addr %s29, 4
          %s2563 = sadd.s32 %s2558, %s2562
          %s2564 = smul.addr %s2563, 128
          %s2565 = scalar_lea.hbm %s4, %s2564
          %s2566 = sshll.u32 %s2554, 4
          %s2567 = int_to_ptr.vmem [resolvable:$true] %s2566
          %2572 = dma.vmem_to_hbm [thread:$0]  %s2567, 512, %s2565, %s2551, 128, 128, 8
        $region48: #{tpu_custom_call.1} parent=35 // pred_fallthru
          _
        // Predicated region
        $region49: #{tpu_custom_call.1} parent=35 // pred_check
          %p2573 = pneg %p178
        $region50: #{tpu_custom_call.1} parent=35 // pred_check_branch
          %2575 = sbr.rel (%p2573) target = $region52
        $region51: #{tpu_custom_call.1} parent=35 // pred_region
          %s2577 = ssub.s32 32, 32
          %2578 = vsyncadd [#allocation7], %s2577
          %s2579 = smul.addr %s28, 32
          %s2580 = scalar_lea.hbm %s5, %s2579
          %s2582 = sshll.u32 [#allocation6], 4
          %s2583 = int_to_ptr.vmem [resolvable:$true] %s2582
          %2585 = dma.vmem_to_hbm [thread:$0]  %s2583, 32, %s2580, [#allocation7]
        $region52: #{tpu_custom_call.1} parent=35 // pred_fallthru
          _
        // Predicated region
        $region53: #{tpu_custom_call.1} parent=35 // pred_check
          %p2586 = pneg %p178
        $region54: #{tpu_custom_call.1} parent=35 // pred_check_branch
          %2588 = sbr.rel (%p2586) target = $region56
        $region55: #{tpu_custom_call.1} parent=35 // pred_region
          %2589 = dma.done [#allocation7], 32
        $region56: #{tpu_custom_call.1} parent=35 // pred_fallthru
          _
      $region36: #{tpu_custom_call.1} parent=5 // pred_fallthru
        _
      %p2590 = scmp.le.s32.totalorder 2, %s19
      // Predicated region
      $region57: #{tpu_custom_call.1} parent=5 // pred_check
        %p2591 = pneg %p2590
      $region58: #{tpu_custom_call.1} parent=5 // pred_check_branch
        %2593 = sbr.rel (%p2591) target = $region60
      $region59: #{tpu_custom_call.1} parent=5 // pred_region
        %s2594 = ssub.s32 %s19, 2
        // Predicated region
        $region61: #{tpu_custom_call.1} parent=59 // pred_check
          %p2595 = pneg %p158
        $region62: #{tpu_custom_call.1} parent=59 // pred_check_branch
          %2597 = sbr.rel (%p2595) target = $region64
        $region63: #{tpu_custom_call.1} parent=59 // pred_region
          %s2598 = sand.u32 %s143, 1
          %s2599 = scalar_lea.sflag [#allocation4], %s2598
          %s2600 = sand.u32 %s143, 1
          %s2601 = smul.addr %s2600, 32
          %s2602 = scalar_lea.vmem [#allocation5], %s2601
          %2603 = dma.done %s2599, 512
        $region64: #{tpu_custom_call.1} parent=59 // pred_fallthru
          _
      $region60: #{tpu_custom_call.1} parent=5 // pred_fallthru
        _
    $region6: #{tpu_custom_call.1} parent=1 // loop_footer
      %s23 = sadd.s32 1, %s19
    $region7: #{tpu_custom_call.1} parent=1 // loop_footer_branch
      %18 = sbr.rel target = $region3
    $region8: #{tpu_custom_call.1} parent=1 // loop_exit
      _
    %2604 = vsyncpa [#allocation3], 1
    %s2605 = scalar_lea.sflag [#allocation3], 1
    %2606 = vsyncpa %s2605, 1
    %2607 = vsyncpa [#allocation4], 1
    %s2608 = scalar_lea.sflag [#allocation4], 1
    %2609 = vsyncpa %s2608, 1
    %2610 = vsyncpa [#allocation7], 1

</llo_original>
